<compile_context>
chip_gen: v7x
topology: tpu7x:2x2x1
jax: 0.10.0
libtpu: 0.0.40
codegen_flags: <defaults>
</compile_context>

<pallas_src>
import numpy as np
import jax
import jax.numpy as jnp
from jax import lax
from jax.experimental import pallas as pl
from jax.experimental.pallas import tpu as pltpu


# ----------------- packed-parameter row offsets (blob = (1152,128) bf16) ----
_C1E = 0        # conv1 Toeplitz, even output cols j=2k : 3 blocks x 16 rows (kh)
_C1O = 48       # conv1 Toeplitz, odd  output cols j=2k+1: 3 blocks x 16 rows
_C2 = 96        # conv2 Toeplitz: 4 blocks x 80 rows, block t = 2*kh + parity
_F1 = 416       # fc1: 2 output halves x 2 kh2 blocks x 64 rows = 256 rows (dense)
_F2 = 672       # fc2: A rows [672,800), B rows [800,928); lanes 0:32 used
_F3 = 928       # fc3: 128 rows (rows 0:32 / lanes 0:4 real, rest zero)
_BIAS = 1056    # 6 bias tiles of 16 rows each (row 0 of each tile holds data)
_ROWS = 1152    # all region starts are multiples of 16 (bf16 sublane tile)


# ----------------------------- Pallas kernel ------------------------------ #
def dqcnn_kernel(x_ref, p_ref, out_ref):
    f32 = jnp.float32
    bf16 = jnp.bfloat16

    def bias(i, width):
        # row 0 of the i-th 16-row bias tile, first `width` lanes, as f32
        blk = p_ref[_BIAS + 16 * i:_BIAS + 16 * i + 16, :].astype(f32)
        return blk[0:1, 0:width]

    X = x_ref[...]                                     # (13, 8, 16) f32, zero-padded

    # ---- conv1: Toeplitz-over-W MXU matmuls (in-kernel im2col) ------------ #
    # rows = 8*i + b (output H x batch), lanes = 16*k + c (output W parity k x ch)
    a1e = jnp.zeros((88, 128), f32)
    a1o = jnp.zeros((88, 128), f32)
    for kh in range(3):
        lhs = X[kh:kh + 11].reshape(88, 16).astype(bf16)       # free 8-aligned view
        a1e = a1e + jnp.dot(lhs, p_ref[_C1E + 16 * kh:_C1E + 16 * kh + 16, :],
                            preferred_element_type=f32)
        a1o = a1o + jnp.dot(lhs, p_ref[_C1O + 16 * kh:_C1O + 16 * kh + 16, :],
                            preferred_element_type=f32)

    # ---- maxpool 2x2 (#1): W-pool = elementwise max of parities ----------- #
    pw = jnp.maximum(jnp.maximum(a1e[:, 0:80], a1o[:, 0:80]) + bias(0, 80), 0.0)
    v = pw.reshape(11, 8, 80)[0:10].reshape(5, 2, 8, 80)       # H-pool, free views
    p1 = jnp.maximum(v[:, 0], v[:, 1])                         # (5, 8, 80)

    # ---- conv2: Toeplitz-over-(pooledW x ch) lanes, even/odd output cols -- #
    a2e = jnp.zeros((32, 128), f32)
    a2o = jnp.zeros((32, 128), f32)
    for kh in range(2):
        lhs = p1[kh:kh + 4].reshape(32, 80).astype(bf16)       # rows = 8*i + b
        r0 = _C2 + 160 * kh
        a2e = a2e + jnp.dot(lhs, p_ref[r0:r0 + 80, :], preferred_element_type=f32)
        a2o = a2o + jnp.dot(lhs, p_ref[r0 + 80:r0 + 160, :], preferred_element_type=f32)

    # ---- maxpool 2x2 (#2) -------------------------------------------------- #
    m2 = jnp.maximum(jnp.maximum(a2e[:, 0:64], a2o[:, 0:64]) + bias(1, 64), 0.0)
    v2 = m2.reshape(4, 8, 64).reshape(2, 2, 8, 64)
    p2 = jnp.maximum(v2[:, 0], v2[:, 1])                       # (2, 8, 64)

    # ---- fc1: dense (64,128) blocks, K=64 accumulated matmuls ------------- #
    q0 = p2[0].astype(bf16)                                    # (8, 64)  kh2 = 0
    q1 = p2[1].astype(bf16)                                    # (8, 64)  kh2 = 1
    z1a = (jnp.dot(q0, p_ref[_F1:_F1 + 64, :], preferred_element_type=f32)
           + jnp.dot(q1, p_ref[_F1 + 64:_F1 + 128, :], preferred_element_type=f32)
           + bias(2, 128))
    z1b = (jnp.dot(q0, p_ref[_F1 + 128:_F1 + 192, :], preferred_element_type=f32)
           + jnp.dot(q1, p_ref[_F1 + 192:_F1 + 256, :], preferred_element_type=f32)
           + bias(3, 128))
    z1a = jnp.maximum(z1a, 0.0)                                # fc1 outputs   0..127
    z1b = jnp.maximum(z1b, 0.0)                                # fc1 outputs 128..255

    # ---- fc2: split at the 128-lane vreg boundary (dense blocks) ---------- #
    z2 = (jnp.dot(z1a.astype(bf16), p_ref[_F2:_F2 + 128, :], preferred_element_type=f32)
          + jnp.dot(z1b.astype(bf16), p_ref[_F2 + 128:_F2 + 256, :],
                    preferred_element_type=f32)
          + bias(4, 128))
    z2 = jnp.maximum(z2, 0.0)                                  # (8, 128), lanes>=32 are 0

    # ---- fc3 (padded to 128 lanes -> lane-dense unmasked output store) ---- #
    out = (jnp.dot(z2.astype(bf16), p_ref[_F3:_F3 + 128, :], preferred_element_type=f32)
           + bias(5, 128))
    out_ref[...] = out.astype(out_ref.dtype)


# ----------------------------- parameters --------------------------------- #
def init_params(key):
    """Deterministic init mimicking PyTorch defaults (U[-1/sqrt(fan_in), ...])."""
    ks = jax.random.split(key, 10)

    def u(k, shape, fan_in):
        bound = 1.0 / np.sqrt(fan_in)
        return jax.random.uniform(k, shape, jnp.float32, -bound, bound)

    return dict(
        conv1_w=u(ks[0], (16, 1, 3, 3), 1 * 3 * 3),
        conv1_b=u(ks[1], (16,), 1 * 3 * 3),
        conv2_w=u(ks[2], (32, 16, 2, 2), 16 * 2 * 2),
        conv2_b=u(ks[3], (32,), 16 * 2 * 2),
        fc1_w=u(ks[4], (256, 128), 128),
        fc1_b=u(ks[5], (256,), 128),
        fc2_w=u(ks[6], (32, 256), 256),
        fc2_b=u(ks[7], (32,), 256),
        fc3_w=u(ks[8], (4, 32), 32),
        fc3_b=u(ks[9], (4,), 32),
    )


def pack_params(p):
    """One-time packing of all 11 tensors into a single (1152, 128) bf16 blob."""
    P = np.zeros((_ROWS, 128), np.float32)

    # conv1 -> per-kh Toeplitz over the W axis, split by output-column parity.
    # even block: [16*kh + w, 16*k + c] = w1[c,0,kh, w-2k]     (j = 2k,   k=0..5)
    # odd  block: [16*kh + w, 16*k + c] = w1[c,0,kh, w-(2k+1)] (j = 2k+1, k=0..4)
    w1 = np.asarray(p['conv1_w'], np.float32)                  # (16,1,3,3)
    for kh in range(3):
        for w in range(13):
            for k in range(6):
                kw = w - 2 * k
                if 0 <= kw <= 2:
                    P[_C1E + 16 * kh + w, 16 * k:16 * k + 16] = w1[:, 0, kh, kw]
            for k in range(5):
                kw = w - (2 * k + 1)
                if 0 <= kw <= 2:
                    P[_C1O + 16 * kh + w, 16 * k:16 * k + 16] = w1[:, 0, kh, kw]

    # conv2 -> Toeplitz over the (pooled-W x 16ch) lane axis.
    # block t = 2*kh + parity: [16*kw1 + c, 32*m + d] = w2[d,c,kh, kw1-(2m+parity)]
    w2 = np.asarray(p['conv2_w'], np.float32)                  # (32,16,2,2)
    for kh in range(2):
        for parity in range(2):
            r0 = _C2 + 80 * (2 * kh + parity)
            for kw1 in range(5):
                for c in range(16):
                    for m in range(2):
                        kw = kw1 - (2 * m + parity)
                        if 0 <= kw <= 1:
                            P[r0 + 16 * kw1 + c, 32 * m:32 * m + 32] = w2[:, c, kh, kw]

    # fc1: row (half, L = 64*kh2 + 32*kw2 + d) holds the 128 outputs of that half
    # for NCHW-flatten feature f = 4*d + 2*kh2 + kw2.
    fw1 = np.asarray(p['fc1_w'], np.float32)                   # (256,128)
    for half in range(2):
        for kh2 in range(2):
            for kw2 in range(2):
                for d in range(32):
                    row = _F1 + 128 * half + 64 * kh2 + 32 * kw2 + d
                    f = 4 * d + 2 * kh2 + kw2
                    P[row, :] = fw1[128 * half:128 * half + 128, f]

    # fc2 split at the 128-feature boundary; fc3 padded to 128x128.
    fw2 = np.asarray(p['fc2_w'], np.float32)                   # (32,256)
    P[_F2:_F2 + 128, 0:32] = fw2[:, 0:128].T
    P[_F2 + 128:_F2 + 256, 0:32] = fw2[:, 128:256].T
    P[_F3:_F3 + 32, 0:4] = np.asarray(p['fc3_w'], np.float32).T

    # biases (row 0 of each 16-row tile); conv biases pre-tiled over lanes.
    P[_BIAS + 0, 0:80] = np.tile(np.asarray(p['conv1_b'], np.float32), 5)
    P[_BIAS + 16, 0:64] = np.tile(np.asarray(p['conv2_b'], np.float32), 2)
    P[_BIAS + 32, 0:128] = np.asarray(p['fc1_b'], np.float32)[0:128]
    P[_BIAS + 48, 0:128] = np.asarray(p['fc1_b'], np.float32)[128:256]
    P[_BIAS + 64, 0:32] = np.asarray(p['fc2_b'], np.float32)
    P[_BIAS + 80, 0:4] = np.asarray(p['fc3_b'], np.float32)

    return jnp.asarray(P).astype(jnp.bfloat16)


# ----------------------------- wrapper ------------------------------------ #
@jax.jit
def dq_forward(x_nchw, packed):
    """x_nchw: (B, 1, 13, 13) float32  ->  (B, 4) float32 q-values."""
    B = x_nchw.shape[0]
    assert x_nchw.shape[1:] == (1, 13, 13)
    assert 1 <= B <= 8, "batch packs into the 8 sublanes of one tile"
    # For B > 8 (or many env states on v7x): tile batch with a leading grid
    # axis and dimension_semantics=("parallel",); unnecessary at B=2.
    xhbw = jnp.transpose(x_nchw[:, 0], (1, 0, 2))              # (13, B, 13)
    xin = jnp.zeros((13, 8, 16), jnp.float32).at[:, :B, :13].set(xhbw)

    vmem = pl.BlockSpec(memory_space=pltpu.MemorySpace.VMEM)
    out = pl.pallas_call(
        dqcnn_kernel,
        out_shape=jax.ShapeDtypeStruct((8, 128), jnp.float32),
        in_specs=[vmem, vmem],          # 2 input DMAs: raw image + packed params
        out_specs=vmem,
    )(xin, packed)
    return out[:B, :4]                  # fc3 was padded to (8, 128)


# ----------------------------- reference ---------------------------------- #
def reference_forward(x_nchw, p):
    """Pure-JAX f32 reference replicating the PyTorch forward exactly."""
    x = jnp.transpose(x_nchw, (0, 2, 3, 1))                    # NHWC
    dn = ('NHWC', 'HWIO', 'NHWC')
    y = lax.conv_general_dilated(x, jnp.transpose(p['conv1_w'], (2, 3, 1, 0)),
                                 (1, 1), 'VALID', dimension_numbers=dn)
    y = jnp.maximum(y + p['conv1_b'], 0.0)
    y = lax.reduce_window(y, -jnp.inf, lax.max, (1, 2, 2, 1), (1, 2, 2, 1),
                          'VALID')
    y = lax.conv_general_dilated(y, jnp.transpose(p['conv2_w'], (2, 3, 1, 0)),
                                 (1, 1), 'VALID', dimension_numbers=dn)
    y = jnp.maximum(y + p['conv2_b'], 0.0)
    y = lax.reduce_window(y, -jnp.inf, lax.max, (1, 2, 2, 1), (1, 2, 2, 1),
                          'VALID')
    y = jnp.transpose(y, (0, 3, 1, 2)).reshape(x.shape[0], -1)  # NCHW flatten
    y = jnp.maximum(y @ p['fc1_w'].T + p['fc1_b'], 0.0)
    y = jnp.maximum(y @ p['fc2_w'].T + p['fc2_b'], 0.0)
    return y @ p['fc3_w'].T + p['fc3_b']


# ----------------------------- main ---------------------------------------- #
if __name__ == "__main__":
    key = jax.random.PRNGKey(0)
    kx, kp = jax.random.split(key)
    params = init_params(kp)
    packed = pack_params(params)

    # Input consistent with fc1 = Linear(4*32, 256): (B, C=1, 13, 13)
    x = jax.random.normal(kx, (2, 1, 13, 13), jnp.float32)

    out = jax.block_until_ready(dq_forward(x, packed))
    ref = jax.block_until_ready(reference_forward(x, params))

    # tolerance absorbs the bf16 weight/activation-cast rounding (errors ~1e-3)
    np.testing.assert_allclose(np.asarray(out), np.asarray(ref),
                               rtol=1e-2, atol=1e-2)
    print("KERNEL_OK")
</pallas_src>

<mosaic_0001>
module attributes {stable_mosaic.version = 11 : i64} {
  func.func @dqcnn_kernel(%arg0: memref<13x8x16xf32, #tpu.memory_space<vmem>>, %arg1: memref<1152x128xbf16, #tpu.memory_space<vmem>>, %arg2: memref<8x128xf32, #tpu.memory_space<vmem>>) attributes {dimension_semantics = [], scalar_prefetch = 0 : i64, scratch_operands = 0 : i64, tpu.core_type = #tpu.core_type<tc>} {
    %c0 = arith.constant 0 : index
    %c0_0 = arith.constant 0 : index
    %c0_1 = arith.constant 0 : index
    %0 = vector.load %arg0[%c0, %c0_0, %c0_1] : memref<13x8x16xf32, #tpu.memory_space<vmem>>, vector<13x8x16xf32>
    %cst = arith.constant 0.000000e+00 : f32
    %1 = vector.broadcast %cst : f32 to vector<88x128xf32>
    %cst_2 = arith.constant 0.000000e+00 : f32
    %2 = vector.broadcast %cst_2 : f32 to vector<88x128xf32>
    %3 = vector.extract_strided_slice %0 {offsets = [0, 0, 0], sizes = [11, 8, 16], strides = [1, 1, 1]} : vector<13x8x16xf32> to vector<11x8x16xf32>
    %4 = vector.shape_cast %3 : vector<11x8x16xf32> to vector<88x16xf32>
    %5 = arith.truncf %4 : vector<88x16xf32> to vector<88x16xbf16>
    %c0_3 = arith.constant 0 : index
    %c0_4 = arith.constant 0 : index
    %6 = vector.load %arg1[%c0_3, %c0_4] : memref<1152x128xbf16, #tpu.memory_space<vmem>>, vector<16x128xbf16>
    %cst_5 = arith.constant dense<0.000000e+00> : vector<88x128xf32>
    %7 = tpu.matmul %5, %6, %cst_5 {dimension_numbers = #tpu.dot_dimension_numbers<[1], [0], [0], [1], [0, 0, 1, 1], [], []>} : vector<88x16xbf16>, vector<16x128xbf16>, vector<88x128xf32> -> vector<88x128xf32>
    %8 = arith.addf %1, %7 : vector<88x128xf32>
    %c48 = arith.constant 48 : index
    %c0_6 = arith.constant 0 : index
    %9 = vector.load %arg1[%c48, %c0_6] : memref<1152x128xbf16, #tpu.memory_space<vmem>>, vector<16x128xbf16>
    %cst_7 = arith.constant dense<0.000000e+00> : vector<88x128xf32>
    %10 = tpu.matmul %5, %9, %cst_7 {dimension_numbers = #tpu.dot_dimension_numbers<[1], [0], [0], [1], [0, 0, 1, 1], [], []>} : vector<88x16xbf16>, vector<16x128xbf16>, vector<88x128xf32> -> vector<88x128xf32>
    %11 = arith.addf %2, %10 : vector<88x128xf32>
    %12 = vector.extract_strided_slice %0 {offsets = [1, 0, 0], sizes = [11, 8, 16], strides = [1, 1, 1]} : vector<13x8x16xf32> to vector<11x8x16xf32>
    %13 = vector.shape_cast %12 : vector<11x8x16xf32> to vector<88x16xf32>
    %14 = arith.truncf %13 : vector<88x16xf32> to vector<88x16xbf16>
    %c16 = arith.constant 16 : index
    %c0_8 = arith.constant 0 : index
    %15 = vector.load %arg1[%c16, %c0_8] : memref<1152x128xbf16, #tpu.memory_space<vmem>>, vector<16x128xbf16>
    %cst_9 = arith.constant dense<0.000000e+00> : vector<88x128xf32>
    %16 = tpu.matmul %14, %15, %cst_9 {dimension_numbers = #tpu.dot_dimension_numbers<[1], [0], [0], [1], [0, 0, 1, 1], [], []>} : vector<88x16xbf16>, vector<16x128xbf16>, vector<88x128xf32> -> vector<88x128xf32>
    %17 = arith.addf %8, %16 : vector<88x128xf32>
    %c64 = arith.constant 64 : index
    %c0_10 = arith.constant 0 : index
    %18 = vector.load %arg1[%c64, %c0_10] : memref<1152x128xbf16, #tpu.memory_space<vmem>>, vector<16x128xbf16>
    %cst_11 = arith.constant dense<0.000000e+00> : vector<88x128xf32>
    %19 = tpu.matmul %14, %18, %cst_11 {dimension_numbers = #tpu.dot_dimension_numbers<[1], [0], [0], [1], [0, 0, 1, 1], [], []>} : vector<88x16xbf16>, vector<16x128xbf16>, vector<88x128xf32> -> vector<88x128xf32>
    %20 = arith.addf %11, %19 : vector<88x128xf32>
    %21 = vector.extract_strided_slice %0 {offsets = [2, 0, 0], sizes = [11, 8, 16], strides = [1, 1, 1]} : vector<13x8x16xf32> to vector<11x8x16xf32>
    %22 = vector.shape_cast %21 : vector<11x8x16xf32> to vector<88x16xf32>
    %23 = arith.truncf %22 : vector<88x16xf32> to vector<88x16xbf16>
    %c32 = arith.constant 32 : index
    %c0_12 = arith.constant 0 : index
    %24 = vector.load %arg1[%c32, %c0_12] : memref<1152x128xbf16, #tpu.memory_space<vmem>>, vector<16x128xbf16>
    %cst_13 = arith.constant dense<0.000000e+00> : vector<88x128xf32>
    %25 = tpu.matmul %23, %24, %cst_13 {dimension_numbers = #tpu.dot_dimension_numbers<[1], [0], [0], [1], [0, 0, 1, 1], [], []>} : vector<88x16xbf16>, vector<16x128xbf16>, vector<88x128xf32> -> vector<88x128xf32>
    %26 = arith.addf %17, %25 : vector<88x128xf32>
    %c80 = arith.constant 80 : index
    %c0_14 = arith.constant 0 : index
    %27 = vector.load %arg1[%c80, %c0_14] : memref<1152x128xbf16, #tpu.memory_space<vmem>>, vector<16x128xbf16>
    %cst_15 = arith.constant dense<0.000000e+00> : vector<88x128xf32>
    %28 = tpu.matmul %23, %27, %cst_15 {dimension_numbers = #tpu.dot_dimension_numbers<[1], [0], [0], [1], [0, 0, 1, 1], [], []>} : vector<88x16xbf16>, vector<16x128xbf16>, vector<88x128xf32> -> vector<88x128xf32>
    %29 = arith.addf %20, %28 : vector<88x128xf32>
    %30 = vector.extract_strided_slice %26 {offsets = [0, 0], sizes = [88, 80], strides = [1, 1]} : vector<88x128xf32> to vector<88x80xf32>
    %31 = vector.extract_strided_slice %29 {offsets = [0, 0], sizes = [88, 80], strides = [1, 1]} : vector<88x128xf32> to vector<88x80xf32>
    %32 = arith.maximumf %30, %31 : vector<88x80xf32>
    %c1056 = arith.constant 1056 : index
    %c0_16 = arith.constant 0 : index
    %33 = vector.load %arg1[%c1056, %c0_16] : memref<1152x128xbf16, #tpu.memory_space<vmem>>, vector<16x128xbf16>
    %34 = arith.extf %33 : vector<16x128xbf16> to vector<16x128xf32>
    %35 = vector.extract_strided_slice %34 {offsets = [0, 0], sizes = [1, 80], strides = [1, 1]} : vector<16x128xf32> to vector<1x80xf32>
    %36 = vector.broadcast %35 : vector<1x80xf32> to vector<88x80xf32>
    %37 = arith.addf %32, %36 : vector<88x80xf32>
    %cst_17 = arith.constant 0.000000e+00 : f32
    %38 = vector.broadcast %cst_17 : f32 to vector<88x80xf32>
    %39 = arith.maximumf %37, %38 : vector<88x80xf32>
    %40 = vector.shape_cast %39 : vector<88x80xf32> to vector<11x8x80xf32>
    %41 = vector.extract_strided_slice %40 {offsets = [0, 0, 0], sizes = [10, 8, 80], strides = [1, 1, 1]} : vector<11x8x80xf32> to vector<10x8x80xf32>
    %42 = vector.shape_cast %41 : vector<10x8x80xf32> to vector<5x2x8x80xf32>
    %43 = vector.extract_strided_slice %42 {offsets = [0, 0, 0, 0], sizes = [5, 1, 8, 80], strides = [1, 1, 1, 1]} : vector<5x2x8x80xf32> to vector<5x1x8x80xf32>
    %44 = vector.shape_cast %43 : vector<5x1x8x80xf32> to vector<5x8x80xf32>
    %45 = vector.extract_strided_slice %42 {offsets = [0, 1, 0, 0], sizes = [5, 1, 8, 80], strides = [1, 1, 1, 1]} : vector<5x2x8x80xf32> to vector<5x1x8x80xf32>
    %46 = vector.shape_cast %45 : vector<5x1x8x80xf32> to vector<5x8x80xf32>
    %47 = arith.maximumf %44, %46 : vector<5x8x80xf32>
    %cst_18 = arith.constant 0.000000e+00 : f32
    %48 = vector.broadcast %cst_18 : f32 to vector<32x128xf32>
    %cst_19 = arith.constant 0.000000e+00 : f32
    %49 = vector.broadcast %cst_19 : f32 to vector<32x128xf32>
    %50 = vector.extract_strided_slice %47 {offsets = [0, 0, 0], sizes = [4, 8, 80], strides = [1, 1, 1]} : vector<5x8x80xf32> to vector<4x8x80xf32>
    %51 = vector.shape_cast %50 : vector<4x8x80xf32> to vector<32x80xf32>
    %52 = arith.truncf %51 : vector<32x80xf32> to vector<32x80xbf16>
    %c96 = arith.constant 96 : index
    %c0_20 = arith.constant 0 : index
    %53 = vector.load %arg1[%c96, %c0_20] : memref<1152x128xbf16, #tpu.memory_space<vmem>>, vector<80x128xbf16>
    %cst_21 = arith.constant dense<0.000000e+00> : vector<32x128xf32>
    %54 = tpu.matmul %52, %53, %cst_21 {dimension_numbers = #tpu.dot_dimension_numbers<[1], [0], [0], [1], [0, 0, 1, 1], [], []>} : vector<32x80xbf16>, vector<80x128xbf16>, vector<32x128xf32> -> vector<32x128xf32>
    %55 = arith.addf %48, %54 : vector<32x128xf32>
    %c176 = arith.constant 176 : index
    %c0_22 = arith.constant 0 : index
    %56 = vector.load %arg1[%c176, %c0_22] : memref<1152x128xbf16, #tpu.memory_space<vmem>>, vector<80x128xbf16>
    %cst_23 = arith.constant dense<0.000000e+00> : vector<32x128xf32>
    %57 = tpu.matmul %52, %56, %cst_23 {dimension_numbers = #tpu.dot_dimension_numbers<[1], [0], [0], [1], [0, 0, 1, 1], [], []>} : vector<32x80xbf16>, vector<80x128xbf16>, vector<32x128xf32> -> vector<32x128xf32>
    %58 = arith.addf %49, %57 : vector<32x128xf32>
    %59 = vector.extract_strided_slice %47 {offsets = [1, 0, 0], sizes = [4, 8, 80], strides = [1, 1, 1]} : vector<5x8x80xf32> to vector<4x8x80xf32>
    %60 = vector.shape_cast %59 : vector<4x8x80xf32> to vector<32x80xf32>
    %61 = arith.truncf %60 : vector<32x80xf32> to vector<32x80xbf16>
    %c256 = arith.constant 256 : index
    %c0_24 = arith.constant 0 : index
    %62 = vector.load %arg1[%c256, %c0_24] : memref<1152x128xbf16, #tpu.memory_space<vmem>>, vector<80x128xbf16>
    %cst_25 = arith.constant dense<0.000000e+00> : vector<32x128xf32>
    %63 = tpu.matmul %61, %62, %cst_25 {dimension_numbers = #tpu.dot_dimension_numbers<[1], [0], [0], [1], [0, 0, 1, 1], [], []>} : vector<32x80xbf16>, vector<80x128xbf16>, vector<32x128xf32> -> vector<32x128xf32>
    %64 = arith.addf %55, %63 : vector<32x128xf32>
    %c336 = arith.constant 336 : index
    %c0_26 = arith.constant 0 : index
    %65 = vector.load %arg1[%c336, %c0_26] : memref<1152x128xbf16, #tpu.memory_space<vmem>>, vector<80x128xbf16>
    %cst_27 = arith.constant dense<0.000000e+00> : vector<32x128xf32>
    %66 = tpu.matmul %61, %65, %cst_27 {dimension_numbers = #tpu.dot_dimension_numbers<[1], [0], [0], [1], [0, 0, 1, 1], [], []>} : vector<32x80xbf16>, vector<80x128xbf16>, vector<32x128xf32> -> vector<32x128xf32>
    %67 = arith.addf %58, %66 : vector<32x128xf32>
    %68 = vector.extract_strided_slice %64 {offsets = [0, 0], sizes = [32, 64], strides = [1, 1]} : vector<32x128xf32> to vector<32x64xf32>
    %69 = vector.extract_strided_slice %67 {offsets = [0, 0], sizes = [32, 64], strides = [1, 1]} : vector<32x128xf32> to vector<32x64xf32>
    %70 = arith.maximumf %68, %69 : vector<32x64xf32>
    %c1072 = arith.constant 1072 : index
    %c0_28 = arith.constant 0 : index
    %71 = vector.load %arg1[%c1072, %c0_28] : memref<1152x128xbf16, #tpu.memory_space<vmem>>, vector<16x128xbf16>
    %72 = arith.extf %71 : vector<16x128xbf16> to vector<16x128xf32>
    %73 = vector.extract_strided_slice %72 {offsets = [0, 0], sizes = [1, 64], strides = [1, 1]} : vector<16x128xf32> to vector<1x64xf32>
    %74 = vector.broadcast %73 : vector<1x64xf32> to vector<32x64xf32>
    %75 = arith.addf %70, %74 : vector<32x64xf32>
    %cst_29 = arith.constant 0.000000e+00 : f32
    %76 = vector.broadcast %cst_29 : f32 to vector<32x64xf32>
    %77 = arith.maximumf %75, %76 : vector<32x64xf32>
    %78 = vector.shape_cast %77 : vector<32x64xf32> to vector<4x8x64xf32>
    %79 = vector.shape_cast %78 : vector<4x8x64xf32> to vector<2x2x8x64xf32>
    %80 = vector.extract_strided_slice %79 {offsets = [0, 0, 0, 0], sizes = [2, 1, 8, 64], strides = [1, 1, 1, 1]} : vector<2x2x8x64xf32> to vector<2x1x8x64xf32>
    %81 = vector.shape_cast %80 : vector<2x1x8x64xf32> to vector<2x8x64xf32>
    %82 = vector.extract_strided_slice %79 {offsets = [0, 1, 0, 0], sizes = [2, 1, 8, 64], strides = [1, 1, 1, 1]} : vector<2x2x8x64xf32> to vector<2x1x8x64xf32>
    %83 = vector.shape_cast %82 : vector<2x1x8x64xf32> to vector<2x8x64xf32>
    %84 = arith.maximumf %81, %83 : vector<2x8x64xf32>
    %85 = vector.extract_strided_slice %84 {offsets = [0, 0, 0], sizes = [1, 8, 64], strides = [1, 1, 1]} : vector<2x8x64xf32> to vector<1x8x64xf32>
    %86 = vector.shape_cast %85 : vector<1x8x64xf32> to vector<8x64xf32>
    %87 = arith.truncf %86 : vector<8x64xf32> to vector<8x64xbf16>
    %88 = vector.extract_strided_slice %84 {offsets = [1, 0, 0], sizes = [1, 8, 64], strides = [1, 1, 1]} : vector<2x8x64xf32> to vector<1x8x64xf32>
    %89 = vector.shape_cast %88 : vector<1x8x64xf32> to vector<8x64xf32>
    %90 = arith.truncf %89 : vector<8x64xf32> to vector<8x64xbf16>
    %c416 = arith.constant 416 : index
    %c0_30 = arith.constant 0 : index
    %91 = vector.load %arg1[%c416, %c0_30] : memref<1152x128xbf16, #tpu.memory_space<vmem>>, vector<64x128xbf16>
    %cst_31 = arith.constant dense<0.000000e+00> : vector<8x128xf32>
    %92 = tpu.matmul %87, %91, %cst_31 {dimension_numbers = #tpu.dot_dimension_numbers<[1], [0], [0], [1], [0, 0, 1, 1], [], []>} : vector<8x64xbf16>, vector<64x128xbf16>, vector<8x128xf32> -> vector<8x128xf32>
    %c480 = arith.constant 480 : index
    %c0_32 = arith.constant 0 : index
    %93 = vector.load %arg1[%c480, %c0_32] : memref<1152x128xbf16, #tpu.memory_space<vmem>>, vector<64x128xbf16>
    %cst_33 = arith.constant dense<0.000000e+00> : vector<8x128xf32>
    %94 = tpu.matmul %90, %93, %cst_33 {dimension_numbers = #tpu.dot_dimension_numbers<[1], [0], [0], [1], [0, 0, 1, 1], [], []>} : vector<8x64xbf16>, vector<64x128xbf16>, vector<8x128xf32> -> vector<8x128xf32>
    %95 = arith.addf %92, %94 : vector<8x128xf32>
    %c1088 = arith.constant 1088 : index
    %c0_34 = arith.constant 0 : index
    %96 = vector.load %arg1[%c1088, %c0_34] : memref<1152x128xbf16, #tpu.memory_space<vmem>>, vector<16x128xbf16>
    %97 = arith.extf %96 : vector<16x128xbf16> to vector<16x128xf32>
    %98 = vector.extract_strided_slice %97 {offsets = [0, 0], sizes = [1, 128], strides = [1, 1]} : vector<16x128xf32> to vector<1x128xf32>
    %99 = vector.broadcast %98 : vector<1x128xf32> to vector<8x128xf32>
    %100 = arith.addf %95, %99 : vector<8x128xf32>
    %c544 = arith.constant 544 : index
    %c0_35 = arith.constant 0 : index
    %101 = vector.load %arg1[%c544, %c0_35] : memref<1152x128xbf16, #tpu.memory_space<vmem>>, vector<64x128xbf16>
    %cst_36 = arith.constant dense<0.000000e+00> : vector<8x128xf32>
    %102 = tpu.matmul %87, %101, %cst_36 {dimension_numbers = #tpu.dot_dimension_numbers<[1], [0], [0], [1], [0, 0, 1, 1], [], []>} : vector<8x64xbf16>, vector<64x128xbf16>, vector<8x128xf32> -> vector<8x128xf32>
    %c608 = arith.constant 608 : index
    %c0_37 = arith.constant 0 : index
    %103 = vector.load %arg1[%c608, %c0_37] : memref<1152x128xbf16, #tpu.memory_space<vmem>>, vector<64x128xbf16>
    %cst_38 = arith.constant dense<0.000000e+00> : vector<8x128xf32>
    %104 = tpu.matmul %90, %103, %cst_38 {dimension_numbers = #tpu.dot_dimension_numbers<[1], [0], [0], [1], [0, 0, 1, 1], [], []>} : vector<8x64xbf16>, vector<64x128xbf16>, vector<8x128xf32> -> vector<8x128xf32>
    %105 = arith.addf %102, %104 : vector<8x128xf32>
    %c1104 = arith.constant 1104 : index
    %c0_39 = arith.constant 0 : index
    %106 = vector.load %arg1[%c1104, %c0_39] : memref<1152x128xbf16, #tpu.memory_space<vmem>>, vector<16x128xbf16>
    %107 = arith.extf %106 : vector<16x128xbf16> to vector<16x128xf32>
    %108 = vector.extract_strided_slice %107 {offsets = [0, 0], sizes = [1, 128], strides = [1, 1]} : vector<16x128xf32> to vector<1x128xf32>
    %109 = vector.broadcast %108 : vector<1x128xf32> to vector<8x128xf32>
    %110 = arith.addf %105, %109 : vector<8x128xf32>
    %cst_40 = arith.constant 0.000000e+00 : f32
    %111 = vector.broadcast %cst_40 : f32 to vector<8x128xf32>
    %112 = arith.maximumf %100, %111 : vector<8x128xf32>
    %cst_41 = arith.constant 0.000000e+00 : f32
    %113 = vector.broadcast %cst_41 : f32 to vector<8x128xf32>
    %114 = arith.maximumf %110, %113 : vector<8x128xf32>
    %115 = arith.truncf %112 : vector<8x128xf32> to vector<8x128xbf16>
    %c672 = arith.constant 672 : index
    %c0_42 = arith.constant 0 : index
    %116 = vector.load %arg1[%c672, %c0_42] : memref<1152x128xbf16, #tpu.memory_space<vmem>>, vector<128x128xbf16>
    %cst_43 = arith.constant dense<0.000000e+00> : vector<8x128xf32>
    %117 = tpu.matmul %115, %116, %cst_43 {dimension_numbers = #tpu.dot_dimension_numbers<[1], [0], [0], [1], [0, 0, 1, 1], [], []>} : vector<8x128xbf16>, vector<128x128xbf16>, vector<8x128xf32> -> vector<8x128xf32>
    %118 = arith.truncf %114 : vector<8x128xf32> to vector<8x128xbf16>
    %c800 = arith.constant 800 : index
    %c0_44 = arith.constant 0 : index
    %119 = vector.load %arg1[%c800, %c0_44] : memref<1152x128xbf16, #tpu.memory_space<vmem>>, vector<128x128xbf16>
    %cst_45 = arith.constant dense<0.000000e+00> : vector<8x128xf32>
    %120 = tpu.matmul %118, %119, %cst_45 {dimension_numbers = #tpu.dot_dimension_numbers<[1], [0], [0], [1], [0, 0, 1, 1], [], []>} : vector<8x128xbf16>, vector<128x128xbf16>, vector<8x128xf32> -> vector<8x128xf32>
    %121 = arith.addf %117, %120 : vector<8x128xf32>
    %c1120 = arith.constant 1120 : index
    %c0_46 = arith.constant 0 : index
    %122 = vector.load %arg1[%c1120, %c0_46] : memref<1152x128xbf16, #tpu.memory_space<vmem>>, vector<16x128xbf16>
    %123 = arith.extf %122 : vector<16x128xbf16> to vector<16x128xf32>
    %124 = vector.extract_strided_slice %123 {offsets = [0, 0], sizes = [1, 128], strides = [1, 1]} : vector<16x128xf32> to vector<1x128xf32>
    %125 = vector.broadcast %124 : vector<1x128xf32> to vector<8x128xf32>
    %126 = arith.addf %121, %125 : vector<8x128xf32>
    %cst_47 = arith.constant 0.000000e+00 : f32
    %127 = vector.broadcast %cst_47 : f32 to vector<8x128xf32>
    %128 = arith.maximumf %126, %127 : vector<8x128xf32>
    %129 = arith.truncf %128 : vector<8x128xf32> to vector<8x128xbf16>
    %c928 = arith.constant 928 : index
    %c0_48 = arith.constant 0 : index
    %130 = vector.load %arg1[%c928, %c0_48] : memref<1152x128xbf16, #tpu.memory_space<vmem>>, vector<128x128xbf16>
    %cst_49 = arith.constant dense<0.000000e+00> : vector<8x128xf32>
    %131 = tpu.matmul %129, %130, %cst_49 {dimension_numbers = #tpu.dot_dimension_numbers<[1], [0], [0], [1], [0, 0, 1, 1], [], []>} : vector<8x128xbf16>, vector<128x128xbf16>, vector<8x128xf32> -> vector<8x128xf32>
    %c1136 = arith.constant 1136 : index
    %c0_50 = arith.constant 0 : index
    %132 = vector.load %arg1[%c1136, %c0_50] : memref<1152x128xbf16, #tpu.memory_space<vmem>>, vector<16x128xbf16>
    %133 = arith.extf %132 : vector<16x128xbf16> to vector<16x128xf32>
    %134 = vector.extract_strided_slice %133 {offsets = [0, 0], sizes = [1, 128], strides = [1, 1]} : vector<16x128xf32> to vector<1x128xf32>
    %135 = vector.broadcast %134 : vector<1x128xf32> to vector<8x128xf32>
    %136 = arith.addf %131, %135 : vector<8x128xf32>
    %c0_51 = arith.constant 0 : index
    %c0_52 = arith.constant 0 : index
    %137 = vector.load %arg2[%c0_51, %c0_52] : memref<8x128xf32, #tpu.memory_space<vmem>>, vector<8x128xf32>
    tpu.vector_store %arg2[%c0_51, %c0_52], %136 {strides = array<i32>} : memref<8x128xf32, #tpu.memory_space<vmem>>, vector<8x128xf32>,
    return
  }
}

</mosaic_0001>

<llo_original>
// kernel: dq_forward.1
$region0: #{dq_forward.1}
  #allocation0 [shape = 'u32[]', space=smem, size = 0x4, offset = 0x4, fixed_abs, tag = 'smem constant byte address 0x4 - core index']
  #allocation1 [shape = 'u32[144,128]{1,0:T(1,128)}', space=vmem, size = 0x12000, scoped, tag = 'internal scratch']
  %s0 = inlined_call_operand.vmem [shape: f32[13,8,16], index: 0, kind: input, shape index: {}]
  %s1 = inlined_call_operand.hbm [shape: bf16[1152,128], index: 1, kind: input, shape index: {}]
  %s2 = inlined_call_operand.vmem [shape: f32[8,128], index: 2, kind: output, shape index: {}]
  %s3 = sld [smem:[#allocation0]]
  $region22: #{dq_forward.1} parent=0
    _
  %s5 = ssub.s32 1, %s3
  %s6 = scalar_select 0, %s5, %s3
  $region1: #{dq_forward.1} parent=0
    #allocation2 [shape = 'u8[294912]{0}', space=vmem, size = 0x48000, scoped, tag = 'input window, operand 1, single buffered']
    #allocation3 [shape = 's32[1]{0}', space=sflag, size = 0x4, scoped, tag = 'scoped memory for dq_forward.1']
    %7 = vsyncpa [#allocation3], 0
    // Predicated region
    $region2: #{dq_forward.1} parent=1 // pred_check
      _
    $region3: #{dq_forward.1} parent=1 // pred_check_branch
      %9 = sbr.rel (0) target = $region5
    $region4: #{dq_forward.1} parent=1 // pred_region
      _
    $region5: #{dq_forward.1} parent=1 // pred_fallthru
      _
    // Predicated region
    $region6: #{dq_forward.1} parent=1 // pred_check
      _
    $region7: #{dq_forward.1} parent=1 // pred_check_branch
      %11 = sbr.rel (0) target = $region9
    $region8: #{dq_forward.1} parent=1 // pred_region
      %s13 = ssub.s32 9216, 9216
      %14 = vsyncadd [#allocation3], %s13
      %s15 = sshll.u32 [#allocation2], 4
      %s16 = int_to_ptr.vmem [resolvable:$true] %s15
      %21 = dma.hbm_to_vmem [thread:$0]  %s1, 9216, %s16, [#allocation3], 64, 64, 4
    $region9: #{dq_forward.1} parent=1 // pred_fallthru
      _
    // Predicated region
    $region10: #{dq_forward.1} parent=1 // pred_check
      _
    $region11: #{dq_forward.1} parent=1 // pred_check_branch
      %23 = sbr.rel (0) target = $region13
    $region12: #{dq_forward.1} parent=1 // pred_region
      %24 = dma.done [#allocation3], 9216
    $region13: #{dq_forward.1} parent=1 // pred_fallthru
      _
    %v26 = vld [vmem:[%s0] sm:$0xff]
    %v27 = vld [vmem:[%s0 + $0x8] sm:$0xff]
    %v28 = vld [vmem:[%s0 + $0x10] sm:$0xff]
    %v29 = vld [vmem:[%s0 + $0x18] sm:$0xff]
    %v30 = vld [vmem:[%s0 + $0x20] sm:$0xff]
    %v31 = vld [vmem:[%s0 + $0x28] sm:$0xff]
    %v32 = vld [vmem:[%s0 + $0x30] sm:$0xff]
    %v33 = vld [vmem:[%s0 + $0x38] sm:$0xff]
    %v34 = vld [vmem:[%s0 + $0x40] sm:$0xff]
    %v35 = vld [vmem:[%s0 + $0x48] sm:$0xff]
    %v36 = vld [vmem:[%s0 + $0x50] sm:$0xff]
    %v37 = vld [vmem:[%s0 + $0x58] sm:$0xff]
    %v38 = vld [vmem:[%s0 + $0x60] sm:$0xff]
    %v39 = vpack.c.bf16 %v27, %v26
    %v40 = vpack.c.bf16 %v29, %v28
    %v41 = vpack.c.bf16 %v31, %v30
    %v42 = vpack.c.bf16 %v33, %v32
    %v43 = vpack.c.bf16 %v35, %v34
    %v44 = vpack.c.bf16 %v36, %v36
    %v45 = vld [vmem:[#allocation2] sm:$0xf]
    %v46 = vld [vmem:[#allocation2 + $0x4] sm:$0xf]
    %v47 = vld [vmem:[#allocation2 + $0x18] sm:$0xf]
    %v48 = vld [vmem:[#allocation2 + $0x1c] sm:$0xf]
    %v49 = vpack.c.bf16 %v28, %v27
    %v50 = vpack.c.bf16 %v30, %v29
    %v51 = vpack.c.bf16 %v32, %v31
    %v52 = vpack.c.bf16 %v34, %v33
    %v53 = vpack.c.bf16 %v36, %v35
    %v54 = vpack.c.bf16 %v37, %v37
    %v55 = vld [vmem:[#allocation2 + $0x8] sm:$0xf]
    %v56 = vld [vmem:[#allocation2 + $0xc] sm:$0xf]
    %v59 = vunpack.c.l.b16 %v55
    %v60 = vunpack.c.l.b16 %v56
    %v61 = vpack.c.b16 %v60, %v59
    %vm63 = vcmask 130048
    %v65 = vsel %vm63, %v49, 0
    %v68 = vsel %vm63, %v50, 0
    %v71 = vsel %vm63, %v51, 0
    %v74 = vsel %vm63, %v52, 0
    %v77 = vsel %vm63, %v53, 0
    %v80 = vsel %vm63, %v54, 0
    %82 = vmatprep.subr.bf16.mxu0 0
    %83 = vmatpush1.bf16.msra.mxu0 %v61
    %84 = vmatprep.subr.bf16.mxu0 0
    %85 = vmatpush1.bf16.msra.mxu0 0
    %86 = vmatprep.subr.bf16.mxu0 0
    %87 = vmatpush1.bf16.msra.mxu0 0
    %88 = vmatprep.subr.bf16.mxu0 0
    %89 = vmatpush1.bf16.msra.mxu0 0
    %90 = vmatprep.subr.bf16.mxu0 0
    %91 = vmatpush1.bf16.msra.mxu0 0
    %92 = vmatprep.subr.bf16.mxu0 0
    %93 = vmatpush1.bf16.msra.mxu0 0
    %94 = vmatprep.subr.bf16.mxu0 0
    %95 = vmatpush1.bf16.msra.mxu0 0
    %96 = vmatprep.subr.bf16.mxu0 0
    %97 = vmatpush1.bf16.msra.mxu0 0
    %98 = vmatprep.subr.bf16.mxu0 0
    %99 = vmatpush1.bf16.msra.mxu0 0
    %100 = vmatprep.subr.bf16.mxu0 0
    %101 = vmatpush1.bf16.msra.mxu0 0
    %102 = vmatprep.subr.bf16.mxu0 0
    %103 = vmatpush1.bf16.msra.mxu0 0
    %104 = vmatprep.subr.bf16.mxu0 0
    %105 = vmatpush1.bf16.msra.mxu0 0
    %106 = vmatprep.subr.bf16.mxu0 0
    %107 = vmatpush1.bf16.msra.mxu0 0
    %108 = vmatprep.subr.bf16.mxu0 0
    %109 = vmatpush1.bf16.msra.mxu0 0
    %110 = vmatprep.subr.bf16.mxu0 0
    %111 = vmatpush1.bf16.msra.mxu0 0
    %112 = vmatprep.subr.bf16.mxu0 0
    %113 = vmatpush1.bf16.msra.mxu0 0
    %114 = vmatprep.mubr.bf16.mxu0 0
    %115 = vmatmul.mubr.bf16.gmra.mrb[0].mxu0 %v65
    %v116 = vpop.f32.mrb[0].mxu0
    %v117 = vadd.f32 0.0, %v116
    %v118 = vpop.f32.mrb[0].mxu0
    %v119 = vpop.f32.mrb[0].mxu0
    %v120 = vadd.f32 0.0, %v119
    %v121 = vpop.f32.mrb[0].mxu0
    %122 = vmatprep.mubr.bf16.mxu0 0
    %123 = vmatmul.mubr.bf16.gmra.mrb[0].mxu0 %v68
    %v124 = vpop.f32.mrb[0].mxu0
    %v125 = vadd.f32 0.0, %v124
    %v126 = vpop.f32.mrb[0].mxu0
    %v127 = vpop.f32.mrb[0].mxu0
    %v128 = vadd.f32 0.0, %v127
    %v129 = vpop.f32.mrb[0].mxu0
    %130 = vmatprep.mubr.bf16.mxu0 0
    %131 = vmatmul.mubr.bf16.gmra.mrb[0].mxu0 %v71
    %v132 = vpop.f32.mrb[0].mxu0
    %v133 = vadd.f32 0.0, %v132
    %v134 = vpop.f32.mrb[0].mxu0
    %v135 = vpop.f32.mrb[0].mxu0
    %v136 = vadd.f32 0.0, %v135
    %v137 = vpop.f32.mrb[0].mxu0
    %138 = vmatprep.mubr.bf16.mxu0 0
    %139 = vmatmul.mubr.bf16.gmra.mrb[0].mxu0 %v74
    %v140 = vpop.f32.mrb[0].mxu0
    %v141 = vadd.f32 0.0, %v140
    %v142 = vpop.f32.mrb[0].mxu0
    %v143 = vpop.f32.mrb[0].mxu0
    %v144 = vadd.f32 0.0, %v143
    %v145 = vpop.f32.mrb[0].mxu0
    %146 = vmatprep.mubr.bf16.mxu0 0
    %147 = vmatmul.mubr.bf16.gmra.mrb[0].mxu0 %v77
    %v148 = vpop.f32.mrb[0].mxu0
    %v149 = vadd.f32 0.0, %v148
    %v150 = vpop.f32.mrb[0].mxu0
    %v151 = vpop.f32.mrb[0].mxu0
    %v152 = vadd.f32 0.0, %v151
    %v153 = vpop.f32.mrb[0].mxu0
    %154 = vmatprep.mubr.bf16.mxu0 0
    %155 = vmatmul.mubr.bf16.gmra.mrb[0].mxu0 %v80
    %v156 = vpop.f32.mrb[0].mxu0
    %v157 = vpop.f32.mrb[0].mxu0
    %v158 = vpop.f32.mrb[0].mxu0
    %v159 = vpop.f32.mrb[0].mxu0
    %160 = vdwg.mxu0
    %v163 = vunpack.c.l.b16 %v45
    %v164 = vunpack.c.l.b16 %v46
    %v165 = vpack.c.b16 %v164, %v163
    %v168 = vsel %vm63, %v39, 0
    %v171 = vsel %vm63, %v40, 0
    %v174 = vsel %vm63, %v41, 0
    %v177 = vsel %vm63, %v42, 0
    %v180 = vsel %vm63, %v43, 0
    %v183 = vsel %vm63, %v44, 0
    %185 = vmatprep.subr.bf16.mxu0 0
    %186 = vmatpush1.bf16.msra.mxu0 %v165
    %187 = vmatprep.subr.bf16.mxu0 0
    %188 = vmatpush1.bf16.msra.mxu0 0
    %189 = vmatprep.subr.bf16.mxu0 0
    %190 = vmatpush1.bf16.msra.mxu0 0
    %191 = vmatprep.subr.bf16.mxu0 0
    %192 = vmatpush1.bf16.msra.mxu0 0
    %193 = vmatprep.subr.bf16.mxu0 0
    %194 = vmatpush1.bf16.msra.mxu0 0
    %195 = vmatprep.subr.bf16.mxu0 0
    %196 = vmatpush1.bf16.msra.mxu0 0
    %197 = vmatprep.subr.bf16.mxu0 0
    %198 = vmatpush1.bf16.msra.mxu0 0
    %199 = vmatprep.subr.bf16.mxu0 0
    %200 = vmatpush1.bf16.msra.mxu0 0
    %201 = vmatprep.subr.bf16.mxu0 0
    %202 = vmatpush1.bf16.msra.mxu0 0
    %203 = vmatprep.subr.bf16.mxu0 0
    %204 = vmatpush1.bf16.msra.mxu0 0
    %205 = vmatprep.subr.bf16.mxu0 0
    %206 = vmatpush1.bf16.msra.mxu0 0
    %207 = vmatprep.subr.bf16.mxu0 0
    %208 = vmatpush1.bf16.msra.mxu0 0
    %209 = vmatprep.subr.bf16.mxu0 0
    %210 = vmatpush1.bf16.msra.mxu0 0
    %211 = vmatprep.subr.bf16.mxu0 0
    %212 = vmatpush1.bf16.msra.mxu0 0
    %213 = vmatprep.subr.bf16.mxu0 0
    %214 = vmatpush1.bf16.msra.mxu0 0
    %215 = vmatprep.subr.bf16.mxu0 0
    %216 = vmatpush1.bf16.msra.mxu0 0
    %217 = vmatprep.mubr.bf16.mxu0 0
    %218 = vmatmul.mubr.bf16.gmra.mrb[0].mxu0 %v168
    %v219 = vpop.f32.mrb[0].mxu0
    %v220 = vadd.f32 %v117, %v219
    %v221 = vpop.f32.mrb[0].mxu0
    %v222 = vpop.f32.mrb[0].mxu0
    %v223 = vadd.f32 %v120, %v222
    %v224 = vpop.f32.mrb[0].mxu0
    %225 = vmatprep.mubr.bf16.mxu0 0
    %226 = vmatmul.mubr.bf16.gmra.mrb[0].mxu0 %v171
    %v227 = vpop.f32.mrb[0].mxu0
    %v228 = vadd.f32 %v125, %v227
    %v229 = vpop.f32.mrb[0].mxu0
    %v230 = vpop.f32.mrb[0].mxu0
    %v231 = vadd.f32 %v128, %v230
    %v232 = vpop.f32.mrb[0].mxu0
    %233 = vmatprep.mubr.bf16.mxu0 0
    %234 = vmatmul.mubr.bf16.gmra.mrb[0].mxu0 %v174
    %v235 = vpop.f32.mrb[0].mxu0
    %v236 = vadd.f32 %v133, %v235
    %v237 = vpop.f32.mrb[0].mxu0
    %v238 = vpop.f32.mrb[0].mxu0
    %v239 = vadd.f32 %v136, %v238
    %v240 = vpop.f32.mrb[0].mxu0
    %241 = vmatprep.mubr.bf16.mxu0 0
    %242 = vmatmul.mubr.bf16.gmra.mrb[0].mxu0 %v177
    %v243 = vpop.f32.mrb[0].mxu0
    %v244 = vadd.f32 %v141, %v243
    %v245 = vpop.f32.mrb[0].mxu0
    %v246 = vpop.f32.mrb[0].mxu0
    %v247 = vadd.f32 %v144, %v246
    %v248 = vpop.f32.mrb[0].mxu0
    %249 = vmatprep.mubr.bf16.mxu0 0
    %250 = vmatmul.mubr.bf16.gmra.mrb[0].mxu0 %v180
    %v251 = vpop.f32.mrb[0].mxu0
    %v252 = vadd.f32 %v149, %v251
    %v253 = vpop.f32.mrb[0].mxu0
    %v254 = vpop.f32.mrb[0].mxu0
    %v255 = vadd.f32 %v152, %v254
    %v256 = vpop.f32.mrb[0].mxu0
    %257 = vmatprep.mubr.bf16.mxu0 0
    %258 = vmatmul.mubr.bf16.gmra.mrb[0].mxu0 %v183
    %v259 = vpop.f32.mrb[0].mxu0
    %v260 = vpop.f32.mrb[0].mxu0
    %v261 = vpop.f32.mrb[0].mxu0
    %v262 = vpop.f32.mrb[0].mxu0
    %263 = vdwg.mxu0
    %v264 = vld [vmem:[#allocation2 + $0x20] sm:$0xf]
    %v265 = vld [vmem:[#allocation2 + $0x24] sm:$0xf]
    %v268 = vunpack.c.l.b16 %v264
    %v269 = vunpack.c.l.b16 %v265
    %v270 = vpack.c.b16 %v269, %v268
    %272 = vmatprep.subr.bf16.mxu0 0
    %273 = vmatpush1.bf16.msra.mxu0 %v270
    %274 = vmatprep.subr.bf16.mxu0 0
    %275 = vmatpush1.bf16.msra.mxu0 0
    %276 = vmatprep.subr.bf16.mxu0 0
    %277 = vmatpush1.bf16.msra.mxu0 0
    %278 = vmatprep.subr.bf16.mxu0 0
    %279 = vmatpush1.bf16.msra.mxu0 0
    %280 = vmatprep.subr.bf16.mxu0 0
    %281 = vmatpush1.bf16.msra.mxu0 0
    %282 = vmatprep.subr.bf16.mxu0 0
    %283 = vmatpush1.bf16.msra.mxu0 0
    %284 = vmatprep.subr.bf16.mxu0 0
    %285 = vmatpush1.bf16.msra.mxu0 0
    %286 = vmatprep.subr.bf16.mxu0 0
    %287 = vmatpush1.bf16.msra.mxu0 0
    %288 = vmatprep.subr.bf16.mxu0 0
    %289 = vmatpush1.bf16.msra.mxu0 0
    %290 = vmatprep.subr.bf16.mxu0 0
    %291 = vmatpush1.bf16.msra.mxu0 0
    %292 = vmatprep.subr.bf16.mxu0 0
    %293 = vmatpush1.bf16.msra.mxu0 0
    %294 = vmatprep.subr.bf16.mxu0 0
    %295 = vmatpush1.bf16.msra.mxu0 0
    %296 = vmatprep.subr.bf16.mxu0 0
    %297 = vmatpush1.bf16.msra.mxu0 0
    %298 = vmatprep.subr.bf16.mxu0 0
    %299 = vmatpush1.bf16.msra.mxu0 0
    %300 = vmatprep.subr.bf16.mxu0 0
    %301 = vmatpush1.bf16.msra.mxu0 0
    %302 = vmatprep.subr.bf16.mxu0 0
    %303 = vmatpush1.bf16.msra.mxu0 0
    %304 = vmatprep.mubr.bf16.mxu0 0
    %305 = vmatmul.mubr.bf16.gmra.mrb[0].mxu0 %v65
    %v306 = vpop.f32.mrb[0].mxu0
    %v307 = vadd.f32 0.0, %v306
    %v308 = vpop.f32.mrb[0].mxu0
    %v309 = vpop.f32.mrb[0].mxu0
    %v310 = vadd.f32 0.0, %v309
    %v311 = vpop.f32.mrb[0].mxu0
    %312 = vmatprep.mubr.bf16.mxu0 0
    %313 = vmatmul.mubr.bf16.gmra.mrb[0].mxu0 %v68
    %v314 = vpop.f32.mrb[0].mxu0
    %v315 = vadd.f32 0.0, %v314
    %v316 = vpop.f32.mrb[0].mxu0
    %v317 = vpop.f32.mrb[0].mxu0
    %v318 = vadd.f32 0.0, %v317
    %v319 = vpop.f32.mrb[0].mxu0
    %320 = vmatprep.mubr.bf16.mxu0 0
    %321 = vmatmul.mubr.bf16.gmra.mrb[0].mxu0 %v71
    %v322 = vpop.f32.mrb[0].mxu0
    %v323 = vadd.f32 0.0, %v322
    %v324 = vpop.f32.mrb[0].mxu0
    %v325 = vpop.f32.mrb[0].mxu0
    %v326 = vadd.f32 0.0, %v325
    %v327 = vpop.f32.mrb[0].mxu0
    %328 = vmatprep.mubr.bf16.mxu0 0
    %329 = vmatmul.mubr.bf16.gmra.mrb[0].mxu0 %v74
    %v330 = vpop.f32.mrb[0].mxu0
    %v331 = vadd.f32 0.0, %v330
    %v332 = vpop.f32.mrb[0].mxu0
    %v333 = vpop.f32.mrb[0].mxu0
    %v334 = vadd.f32 0.0, %v333
    %v335 = vpop.f32.mrb[0].mxu0
    %336 = vmatprep.mubr.bf16.mxu0 0
    %337 = vmatmul.mubr.bf16.gmra.mrb[0].mxu0 %v77
    %v338 = vpop.f32.mrb[0].mxu0
    %v339 = vadd.f32 0.0, %v338
    %v340 = vpop.f32.mrb[0].mxu0
    %v341 = vpop.f32.mrb[0].mxu0
    %v342 = vadd.f32 0.0, %v341
    %v343 = vpop.f32.mrb[0].mxu0
    %344 = vmatprep.mubr.bf16.mxu0 0
    %345 = vmatmul.mubr.bf16.gmra.mrb[0].mxu0 %v80
    %v346 = vpop.f32.mrb[0].mxu0
    %v347 = vpop.f32.mrb[0].mxu0
    %v348 = vpop.f32.mrb[0].mxu0
    %v349 = vpop.f32.mrb[0].mxu0
    %350 = vdwg.mxu0
    %v353 = vunpack.c.l.b16 %v47
    %v354 = vunpack.c.l.b16 %v48
    %v355 = vpack.c.b16 %v354, %v353
    %357 = vmatprep.subr.bf16.mxu0 0
    %358 = vmatpush1.bf16.msra.mxu0 %v355
    %359 = vmatprep.subr.bf16.mxu0 0
    %360 = vmatpush1.bf16.msra.mxu0 0
    %361 = vmatprep.subr.bf16.mxu0 0
    %362 = vmatpush1.bf16.msra.mxu0 0
    %363 = vmatprep.subr.bf16.mxu0 0
    %364 = vmatpush1.bf16.msra.mxu0 0
    %365 = vmatprep.subr.bf16.mxu0 0
    %366 = vmatpush1.bf16.msra.mxu0 0
    %367 = vmatprep.subr.bf16.mxu0 0
    %368 = vmatpush1.bf16.msra.mxu0 0
    %369 = vmatprep.subr.bf16.mxu0 0
    %370 = vmatpush1.bf16.msra.mxu0 0
    %371 = vmatprep.subr.bf16.mxu0 0
    %372 = vmatpush1.bf16.msra.mxu0 0
    %373 = vmatprep.subr.bf16.mxu0 0
    %374 = vmatpush1.bf16.msra.mxu0 0
    %375 = vmatprep.subr.bf16.mxu0 0
    %376 = vmatpush1.bf16.msra.mxu0 0
    %377 = vmatprep.subr.bf16.mxu0 0
    %378 = vmatpush1.bf16.msra.mxu0 0
    %379 = vmatprep.subr.bf16.mxu0 0
    %380 = vmatpush1.bf16.msra.mxu0 0
    %381 = vmatprep.subr.bf16.mxu0 0
    %382 = vmatpush1.bf16.msra.mxu0 0
    %383 = vmatprep.subr.bf16.mxu0 0
    %384 = vmatpush1.bf16.msra.mxu0 0
    %385 = vmatprep.subr.bf16.mxu0 0
    %386 = vmatpush1.bf16.msra.mxu0 0
    %387 = vmatprep.subr.bf16.mxu0 0
    %388 = vmatpush1.bf16.msra.mxu0 0
    %389 = vmatprep.mubr.bf16.mxu0 0
    %390 = vmatmul.mubr.bf16.gmra.mrb[0].mxu0 %v168
    %v391 = vpop.f32.mrb[0].mxu0
    %v392 = vadd.f32 %v307, %v391
    %v393 = vpop.f32.mrb[0].mxu0
    %v394 = vpop.f32.mrb[0].mxu0
    %v395 = vadd.f32 %v310, %v394
    %v396 = vpop.f32.mrb[0].mxu0
    %397 = vmatprep.mubr.bf16.mxu0 0
    %398 = vmatmul.mubr.bf16.gmra.mrb[0].mxu0 %v171
    %v399 = vpop.f32.mrb[0].mxu0
    %v400 = vadd.f32 %v315, %v399
    %v401 = vpop.f32.mrb[0].mxu0
    %v402 = vpop.f32.mrb[0].mxu0
    %v403 = vadd.f32 %v318, %v402
    %v404 = vpop.f32.mrb[0].mxu0
    %405 = vmatprep.mubr.bf16.mxu0 0
    %406 = vmatmul.mubr.bf16.gmra.mrb[0].mxu0 %v174
    %v407 = vpop.f32.mrb[0].mxu0
    %v408 = vadd.f32 %v323, %v407
    %v409 = vpop.f32.mrb[0].mxu0
    %v410 = vpop.f32.mrb[0].mxu0
    %v411 = vadd.f32 %v326, %v410
    %v412 = vpop.f32.mrb[0].mxu0
    %413 = vmatprep.mubr.bf16.mxu0 0
    %414 = vmatmul.mubr.bf16.gmra.mrb[0].mxu0 %v177
    %v415 = vpop.f32.mrb[0].mxu0
    %v416 = vadd.f32 %v331, %v415
    %v417 = vpop.f32.mrb[0].mxu0
    %v418 = vpop.f32.mrb[0].mxu0
    %v419 = vadd.f32 %v334, %v418
    %v420 = vpop.f32.mrb[0].mxu0
    %421 = vmatprep.mubr.bf16.mxu0 0
    %422 = vmatmul.mubr.bf16.gmra.mrb[0].mxu0 %v180
    %v423 = vpop.f32.mrb[0].mxu0
    %v424 = vadd.f32 %v339, %v423
    %v425 = vpop.f32.mrb[0].mxu0
    %v426 = vpop.f32.mrb[0].mxu0
    %v427 = vadd.f32 %v342, %v426
    %v428 = vpop.f32.mrb[0].mxu0
    %429 = vmatprep.mubr.bf16.mxu0 0
    %430 = vmatmul.mubr.bf16.gmra.mrb[0].mxu0 %v183
    %v431 = vpop.f32.mrb[0].mxu0
    %v432 = vpop.f32.mrb[0].mxu0
    %v433 = vpop.f32.mrb[0].mxu0
    %v434 = vpop.f32.mrb[0].mxu0
    %435 = vdwg.mxu0
    %v436 = vpack.c.bf16 %v37, %v36
    %v437 = vpack.c.bf16 %v38, %v38
    %v438 = vld [vmem:[#allocation2 + $0x10] sm:$0xf]
    %v439 = vld [vmem:[#allocation2 + $0x14] sm:$0xf]
    %v442 = vunpack.c.l.b16 %v438
    %v443 = vunpack.c.l.b16 %v439
    %v444 = vpack.c.b16 %v443, %v442
    %v447 = vsel %vm63, %v436, 0
    %v450 = vsel %vm63, %v437, 0
    %452 = vmatprep.subr.bf16.mxu0 0
    %453 = vmatpush1.bf16.msra.mxu0 %v444
    %454 = vmatprep.subr.bf16.mxu0 0
    %455 = vmatpush1.bf16.msra.mxu0 0
    %456 = vmatprep.subr.bf16.mxu0 0
    %457 = vmatpush1.bf16.msra.mxu0 0
    %458 = vmatprep.subr.bf16.mxu0 0
    %459 = vmatpush1.bf16.msra.mxu0 0
    %460 = vmatprep.subr.bf16.mxu0 0
    %461 = vmatpush1.bf16.msra.mxu0 0
    %462 = vmatprep.subr.bf16.mxu0 0
    %463 = vmatpush1.bf16.msra.mxu0 0
    %464 = vmatprep.subr.bf16.mxu0 0
    %465 = vmatpush1.bf16.msra.mxu0 0
    %466 = vmatprep.subr.bf16.mxu0 0
    %467 = vmatpush1.bf16.msra.mxu0 0
    %468 = vmatprep.subr.bf16.mxu0 0
    %469 = vmatpush1.bf16.msra.mxu0 0
    %470 = vmatprep.subr.bf16.mxu0 0
    %471 = vmatpush1.bf16.msra.mxu0 0
    %472 = vmatprep.subr.bf16.mxu0 0
    %473 = vmatpush1.bf16.msra.mxu0 0
    %474 = vmatprep.subr.bf16.mxu0 0
    %475 = vmatpush1.bf16.msra.mxu0 0
    %476 = vmatprep.subr.bf16.mxu0 0
    %477 = vmatpush1.bf16.msra.mxu0 0
    %478 = vmatprep.subr.bf16.mxu0 0
    %479 = vmatpush1.bf16.msra.mxu0 0
    %480 = vmatprep.subr.bf16.mxu0 0
    %481 = vmatpush1.bf16.msra.mxu0 0
    %482 = vmatprep.subr.bf16.mxu0 0
    %483 = vmatpush1.bf16.msra.mxu0 0
    %484 = vmatprep.mubr.bf16.mxu0 0
    %485 = vmatmul.mubr.bf16.gmra.mrb[0].mxu0 %v171
    %v486 = vpop.f32.mrb[0].mxu0
    %v487 = vadd.f32 0.0, %v486
    %v488 = vpop.f32.mrb[0].mxu0
    %v489 = vpop.f32.mrb[0].mxu0
    %v490 = vadd.f32 0.0, %v489
    %v491 = vpop.f32.mrb[0].mxu0
    %492 = vmatprep.mubr.bf16.mxu0 0
    %493 = vmatmul.mubr.bf16.gmra.mrb[0].mxu0 %v174
    %v494 = vpop.f32.mrb[0].mxu0
    %v495 = vadd.f32 0.0, %v494
    %v496 = vpop.f32.mrb[0].mxu0
    %v497 = vpop.f32.mrb[0].mxu0
    %v498 = vadd.f32 0.0, %v497
    %v499 = vpop.f32.mrb[0].mxu0
    %500 = vmatprep.mubr.bf16.mxu0 0
    %501 = vmatmul.mubr.bf16.gmra.mrb[0].mxu0 %v177
    %v502 = vpop.f32.mrb[0].mxu0
    %v503 = vadd.f32 0.0, %v502
    %v504 = vpop.f32.mrb[0].mxu0
    %v505 = vpop.f32.mrb[0].mxu0
    %v506 = vadd.f32 0.0, %v505
    %v507 = vpop.f32.mrb[0].mxu0
    %508 = vmatprep.mubr.bf16.mxu0 0
    %509 = vmatmul.mubr.bf16.gmra.mrb[0].mxu0 %v180
    %v510 = vpop.f32.mrb[0].mxu0
    %v511 = vadd.f32 0.0, %v510
    %v512 = vpop.f32.mrb[0].mxu0
    %v513 = vpop.f32.mrb[0].mxu0
    %v514 = vadd.f32 0.0, %v513
    %v515 = vpop.f32.mrb[0].mxu0
    %516 = vmatprep.mubr.bf16.mxu0 0
    %517 = vmatmul.mubr.bf16.gmra.mrb[0].mxu0 %v447
    %v518 = vpop.f32.mrb[0].mxu0
    %v519 = vadd.f32 0.0, %v518
    %v520 = vpop.f32.mrb[0].mxu0
    %v521 = vpop.f32.mrb[0].mxu0
    %v522 = vadd.f32 0.0, %v521
    %v523 = vpop.f32.mrb[0].mxu0
    %524 = vmatprep.mubr.bf16.mxu0 0
    %525 = vmatmul.mubr.bf16.gmra.mrb[0].mxu0 %v450
    %v526 = vpop.f32.mrb[0].mxu0
    %v527 = vpop.f32.mrb[0].mxu0
    %v528 = vpop.f32.mrb[0].mxu0
    %v529 = vpop.f32.mrb[0].mxu0
    %530 = vdwg.mxu0
    %v531 = vadd.f32 %v220, %v487
    %v532 = vadd.f32 %v223, %v490
    %v533 = vadd.f32 %v228, %v495
    %v534 = vadd.f32 %v231, %v498
    %v535 = vadd.f32 %v236, %v503
    %v536 = vadd.f32 %v239, %v506
    %v537 = vadd.f32 %v244, %v511
    %v538 = vadd.f32 %v247, %v514
    %v539 = vadd.f32 %v252, %v519
    %v540 = vadd.f32 %v255, %v522
    %v541 = vld [vmem:[#allocation2 + $0x28] sm:$0xf]
    %v542 = vld [vmem:[#allocation2 + $0x2c] sm:$0xf]
    %v545 = vunpack.c.l.b16 %v541
    %v546 = vunpack.c.l.b16 %v542
    %v547 = vpack.c.b16 %v546, %v545
    %549 = vmatprep.subr.bf16.mxu0 0
    %550 = vmatpush1.bf16.msra.mxu0 %v547
    %551 = vmatprep.subr.bf16.mxu0 0
    %552 = vmatpush1.bf16.msra.mxu0 0
    %553 = vmatprep.subr.bf16.mxu0 0
    %554 = vmatpush1.bf16.msra.mxu0 0
    %555 = vmatprep.subr.bf16.mxu0 0
    %556 = vmatpush1.bf16.msra.mxu0 0
    %557 = vmatprep.subr.bf16.mxu0 0
    %558 = vmatpush1.bf16.msra.mxu0 0
    %559 = vmatprep.subr.bf16.mxu0 0
    %560 = vmatpush1.bf16.msra.mxu0 0
    %561 = vmatprep.subr.bf16.mxu0 0
    %562 = vmatpush1.bf16.msra.mxu0 0
    %563 = vmatprep.subr.bf16.mxu0 0
    %564 = vmatpush1.bf16.msra.mxu0 0
    %565 = vmatprep.subr.bf16.mxu0 0
    %566 = vmatpush1.bf16.msra.mxu0 0
    %567 = vmatprep.subr.bf16.mxu0 0
    %568 = vmatpush1.bf16.msra.mxu0 0
    %569 = vmatprep.subr.bf16.mxu0 0
    %570 = vmatpush1.bf16.msra.mxu0 0
    %571 = vmatprep.subr.bf16.mxu0 0
    %572 = vmatpush1.bf16.msra.mxu0 0
    %573 = vmatprep.subr.bf16.mxu0 0
    %574 = vmatpush1.bf16.msra.mxu0 0
    %575 = vmatprep.subr.bf16.mxu0 0
    %576 = vmatpush1.bf16.msra.mxu0 0
    %577 = vmatprep.subr.bf16.mxu0 0
    %578 = vmatpush1.bf16.msra.mxu0 0
    %579 = vmatprep.subr.bf16.mxu0 0
    %580 = vmatpush1.bf16.msra.mxu0 0
    %581 = vmatprep.mubr.bf16.mxu0 0
    %582 = vmatmul.mubr.bf16.gmra.mrb[0].mxu0 %v171
    %v583 = vpop.f32.mrb[0].mxu0
    %v584 = vadd.f32 0.0, %v583
    %v585 = vpop.f32.mrb[0].mxu0
    %v586 = vpop.f32.mrb[0].mxu0
    %v587 = vadd.f32 0.0, %v586
    %v588 = vpop.f32.mrb[0].mxu0
    %589 = vmatprep.mubr.bf16.mxu0 0
    %590 = vmatmul.mubr.bf16.gmra.mrb[0].mxu0 %v174
    %v591 = vpop.f32.mrb[0].mxu0
    %v592 = vadd.f32 0.0, %v591
    %v593 = vpop.f32.mrb[0].mxu0
    %v594 = vpop.f32.mrb[0].mxu0
    %v595 = vadd.f32 0.0, %v594
    %v596 = vpop.f32.mrb[0].mxu0
    %597 = vmatprep.mubr.bf16.mxu0 0
    %598 = vmatmul.mubr.bf16.gmra.mrb[0].mxu0 %v177
    %v599 = vpop.f32.mrb[0].mxu0
    %v600 = vadd.f32 0.0, %v599
    %v601 = vpop.f32.mrb[0].mxu0
    %v602 = vpop.f32.mrb[0].mxu0
    %v603 = vadd.f32 0.0, %v602
    %v604 = vpop.f32.mrb[0].mxu0
    %605 = vmatprep.mubr.bf16.mxu0 0
    %606 = vmatmul.mubr.bf16.gmra.mrb[0].mxu0 %v180
    %v607 = vpop.f32.mrb[0].mxu0
    %v608 = vadd.f32 0.0, %v607
    %v609 = vpop.f32.mrb[0].mxu0
    %v610 = vpop.f32.mrb[0].mxu0
    %v611 = vadd.f32 0.0, %v610
    %v612 = vpop.f32.mrb[0].mxu0
    %613 = vmatprep.mubr.bf16.mxu0 0
    %614 = vmatmul.mubr.bf16.gmra.mrb[0].mxu0 %v447
    %v615 = vpop.f32.mrb[0].mxu0
    %v616 = vadd.f32 0.0, %v615
    %v617 = vpop.f32.mrb[0].mxu0
    %v618 = vpop.f32.mrb[0].mxu0
    %v619 = vadd.f32 0.0, %v618
    %v620 = vpop.f32.mrb[0].mxu0
    %621 = vmatprep.mubr.bf16.mxu0 0
    %622 = vmatmul.mubr.bf16.gmra.mrb[0].mxu0 %v450
    %v623 = vpop.f32.mrb[0].mxu0
    %v624 = vpop.f32.mrb[0].mxu0
    %v625 = vpop.f32.mrb[0].mxu0
    %v626 = vpop.f32.mrb[0].mxu0
    %627 = vdwg.mxu0
    %v628 = vadd.f32 %v392, %v584
    %v629 = vadd.f32 %v395, %v587
    %v630 = vadd.f32 %v400, %v592
    %v631 = vadd.f32 %v403, %v595
    %v632 = vadd.f32 %v408, %v600
    %v633 = vadd.f32 %v411, %v603
    %v634 = vadd.f32 %v416, %v608
    %v635 = vadd.f32 %v419, %v611
    %v636 = vadd.f32 %v424, %v616
    %v637 = vadd.f32 %v427, %v619
    %v638 = vmax.f32 %v531, %v628
    %v639 = vmax.f32 %v532, %v629
    %v640 = vmax.f32 %v533, %v630
    %v641 = vmax.f32 %v534, %v631
    %v642 = vmax.f32 %v535, %v632
    %v643 = vmax.f32 %v536, %v633
    %v644 = vmax.f32 %v537, %v634
    %v645 = vmax.f32 %v538, %v635
    %v646 = vmax.f32 %v539, %v636
    %v647 = vmax.f32 %v540, %v637
    %v648 = vld [vmem:[#allocation2 + $0x210] sm:$0xf]
    %v649 = vunpack.c.l.bf16 %v648
    %v650 = vlaneseq
    %v651 = vshrl.u32 %v650, 7
    %v652 = vsub.s32 0, %v651
    %v653 = vrot.slane %v649, %v652
    %v654 = vadd.f32 %v638, %v653
    %v655 = vadd.f32 %v639, %v653
    %v656 = vadd.f32 %v640, %v653
    %v657 = vadd.f32 %v641, %v653
    %v658 = vadd.f32 %v642, %v653
    %v659 = vadd.f32 %v643, %v653
    %v660 = vadd.f32 %v644, %v653
    %v661 = vadd.f32 %v645, %v653
    %v662 = vadd.f32 %v646, %v653
    %v663 = vadd.f32 %v647, %v653
    %v664 = vmax.f32 %v654, 0.0
    %v665 = vmax.f32 %v655, 0.0
    %v666 = vmax.f32 %v656, 0.0
    %v667 = vmax.f32 %v657, 0.0
    %v668 = vmax.f32 %v658, 0.0
    %v669 = vmax.f32 %v659, 0.0
    %v670 = vmax.f32 %v660, 0.0
    %v671 = vmax.f32 %v661, 0.0
    %v672 = vmax.f32 %v662, 0.0
    %v673 = vmax.f32 %v663, 0.0
    %v674 = vmax.f32 %v664, %v665
    %v675 = vmax.f32 %v666, %v667
    %v676 = vmax.f32 %v668, %v669
    %v677 = vmax.f32 %v670, %v671
    %v678 = vmax.f32 %v672, %v673
    %v679 = vpack.c.bf16 %v675, %v674
    %v680 = vpack.c.bf16 %v677, %v676
    %v681 = vld [vmem:[#allocation2 + $0x30] sm:$0xf]
    %v682 = vld [vmem:[#allocation2 + $0x34] sm:$0xf]
    %v683 = vld [vmem:[#allocation2 + $0x38] sm:$0xf]
    %v684 = vld [vmem:[#allocation2 + $0x3c] sm:$0xf]
    %v685 = vld [vmem:[#allocation2 + $0x40] sm:$0xf]
    %v686 = vld [vmem:[#allocation2 + $0x44] sm:$0xf]
    %v687 = vld [vmem:[#allocation2 + $0x48] sm:$0xf]
    %v688 = vld [vmem:[#allocation2 + $0x4c] sm:$0xf]
    %v689 = vld [vmem:[#allocation2 + $0x50] sm:$0xf]
    %v690 = vld [vmem:[#allocation2 + $0x54] sm:$0xf]
    %v691 = vld [vmem:[#allocation2 + $0x58] sm:$0xf]
    %v692 = vld [vmem:[#allocation2 + $0x5c] sm:$0xf]
    %v693 = vld [vmem:[#allocation2 + $0x60] sm:$0xf]
    %v694 = vld [vmem:[#allocation2 + $0x64] sm:$0xf]
    %v695 = vld [vmem:[#allocation2 + $0x68] sm:$0xf]
    %v696 = vld [vmem:[#allocation2 + $0x6c] sm:$0xf]
    %v697 = vld [vmem:[#allocation2 + $0x70] sm:$0xf]
    %v698 = vld [vmem:[#allocation2 + $0x74] sm:$0xf]
    %v699 = vld [vmem:[#allocation2 + $0x78] sm:$0xf]
    %v700 = vld [vmem:[#allocation2 + $0x7c] sm:$0xf]
    %v701 = vpack.c.bf16 %v676, %v675
    %v702 = vpack.c.bf16 %v678, %v677
    %v703 = vld [vmem:[#allocation2 + $0x80] sm:$0xf]
    %v704 = vld [vmem:[#allocation2 + $0x84] sm:$0xf]
    %v705 = vld [vmem:[#allocation2 + $0x88] sm:$0xf]
    %v706 = vld [vmem:[#allocation2 + $0x8c] sm:$0xf]
    %v707 = vld [vmem:[#allocation2 + $0x90] sm:$0xf]
    %v708 = vld [vmem:[#allocation2 + $0x94] sm:$0xf]
    %v709 = vld [vmem:[#allocation2 + $0x98] sm:$0xf]
    %v710 = vld [vmem:[#allocation2 + $0x9c] sm:$0xf]
    %v711 = vld [vmem:[#allocation2 + $0xa0] sm:$0xf]
    %v712 = vld [vmem:[#allocation2 + $0xa4] sm:$0xf]
    %v723 = vunpack.c.l.b16 %v703
    %v724 = vunpack.c.l.b16 %v704
    %v725 = vunpack.c.l.b16 %v705
    %v726 = vunpack.c.l.b16 %v706
    %v727 = vunpack.c.l.b16 %v707
    %v728 = vunpack.c.l.b16 %v708
    %v729 = vunpack.c.l.b16 %v709
    %v730 = vunpack.c.l.b16 %v710
    %v731 = vunpack.c.l.b16 %v711
    %v732 = vunpack.c.l.b16 %v712
    %v733 = vpack.c.b16 %v724, %v723
    %v734 = vpack.c.b16 %v726, %v725
    %v735 = vpack.c.b16 %v728, %v727
    %v736 = vpack.c.b16 %v730, %v729
    %v737 = vpack.c.b16 %v732, %v731
    %vm743 = vcmask 654336
    %v745 = vsel %vm743, %v701, 0
    %v748 = vsel %vm743, %v702, 0
    %750 = vmatprep.subr.bf16.mxu0 0
    %751 = vmatpush1.bf16.msra.mxu0 %v733
    %752 = vmatprep.subr.bf16.mxu0 0
    %753 = vmatpush1.bf16.msra.mxu0 %v734
    %754 = vmatprep.subr.bf16.mxu0 0
    %755 = vmatpush1.bf16.msra.mxu0 %v735
    %756 = vmatprep.subr.bf16.mxu0 0
    %757 = vmatpush1.bf16.msra.mxu0 %v736
    %758 = vmatprep.subr.bf16.mxu0 0
    %759 = vmatpush1.bf16.msra.mxu0 %v737
    %760 = vmatprep.subr.bf16.mxu0 0
    %761 = vmatpush1.bf16.msra.mxu0 0
    %762 = vmatprep.subr.bf16.mxu0 0
    %763 = vmatpush1.bf16.msra.mxu0 0
    %764 = vmatprep.subr.bf16.mxu0 0
    %765 = vmatpush1.bf16.msra.mxu0 0
    %766 = vmatprep.subr.bf16.mxu0 0
    %767 = vmatpush1.bf16.msra.mxu0 0
    %768 = vmatprep.subr.bf16.mxu0 0
    %769 = vmatpush1.bf16.msra.mxu0 0
    %770 = vmatprep.subr.bf16.mxu0 0
    %771 = vmatpush1.bf16.msra.mxu0 0
    %772 = vmatprep.subr.bf16.mxu0 0
    %773 = vmatpush1.bf16.msra.mxu0 0
    %774 = vmatprep.subr.bf16.mxu0 0
    %775 = vmatpush1.bf16.msra.mxu0 0
    %776 = vmatprep.subr.bf16.mxu0 0
    %777 = vmatpush1.bf16.msra.mxu0 0
    %778 = vmatprep.subr.bf16.mxu0 0
    %779 = vmatpush1.bf16.msra.mxu0 0
    %780 = vmatprep.subr.bf16.mxu0 0
    %781 = vmatpush1.bf16.msra.mxu0 0
    %782 = vmatprep.mubr.bf16.mxu0 0
    %783 = vmatmul.mubr.bf16.gmra.mrb[0].mxu0 %v745
    %v784 = vpop.f32.mrb[0].mxu0
    %v785 = vadd.f32 0.0, %v784
    %v786 = vpop.f32.mrb[0].mxu0
    %v787 = vpop.f32.mrb[0].mxu0
    %v788 = vadd.f32 0.0, %v787
    %v789 = vpop.f32.mrb[0].mxu0
    %790 = vmatprep.mubr.bf16.mxu0 0
    %791 = vmatmul.mubr.bf16.gmra.mrb[0].mxu0 %v748
    %v792 = vpop.f32.mrb[0].mxu0
    %v793 = vadd.f32 0.0, %v792
    %v794 = vpop.f32.mrb[0].mxu0
    %v795 = vpop.f32.mrb[0].mxu0
    %v796 = vadd.f32 0.0, %v795
    %v797 = vpop.f32.mrb[0].mxu0
    %798 = vdwg.mxu0
    %v809 = vunpack.c.l.b16 %v681
    %v810 = vunpack.c.l.b16 %v682
    %v811 = vunpack.c.l.b16 %v683
    %v812 = vunpack.c.l.b16 %v684
    %v813 = vunpack.c.l.b16 %v685
    %v814 = vunpack.c.l.b16 %v686
    %v815 = vunpack.c.l.b16 %v687
    %v816 = vunpack.c.l.b16 %v688
    %v817 = vunpack.c.l.b16 %v689
    %v818 = vunpack.c.l.b16 %v690
    %v819 = vpack.c.b16 %v810, %v809
    %v820 = vpack.c.b16 %v812, %v811
    %v821 = vpack.c.b16 %v814, %v813
    %v822 = vpack.c.b16 %v816, %v815
    %v823 = vpack.c.b16 %v818, %v817
    %v830 = vsel %vm743, %v679, 0
    %v833 = vsel %vm743, %v680, 0
    %835 = vmatprep.subr.bf16.mxu0 0
    %836 = vmatpush1.bf16.msra.mxu0 %v819
    %837 = vmatprep.subr.bf16.mxu0 0
    %838 = vmatpush1.bf16.msra.mxu0 %v820
    %839 = vmatprep.subr.bf16.mxu0 0
    %840 = vmatpush1.bf16.msra.mxu0 %v821
    %841 = vmatprep.subr.bf16.mxu0 0
    %842 = vmatpush1.bf16.msra.mxu0 %v822
    %843 = vmatprep.subr.bf16.mxu0 0
    %844 = vmatpush1.bf16.msra.mxu0 %v823
    %845 = vmatprep.subr.bf16.mxu0 0
    %846 = vmatpush1.bf16.msra.mxu0 0
    %847 = vmatprep.subr.bf16.mxu0 0
    %848 = vmatpush1.bf16.msra.mxu0 0
    %849 = vmatprep.subr.bf16.mxu0 0
    %850 = vmatpush1.bf16.msra.mxu0 0
    %851 = vmatprep.subr.bf16.mxu0 0
    %852 = vmatpush1.bf16.msra.mxu0 0
    %853 = vmatprep.subr.bf16.mxu0 0
    %854 = vmatpush1.bf16.msra.mxu0 0
    %855 = vmatprep.subr.bf16.mxu0 0
    %856 = vmatpush1.bf16.msra.mxu0 0
    %857 = vmatprep.subr.bf16.mxu0 0
    %858 = vmatpush1.bf16.msra.mxu0 0
    %859 = vmatprep.subr.bf16.mxu0 0
    %860 = vmatpush1.bf16.msra.mxu0 0
    %861 = vmatprep.subr.bf16.mxu0 0
    %862 = vmatpush1.bf16.msra.mxu0 0
    %863 = vmatprep.subr.bf16.mxu0 0
    %864 = vmatpush1.bf16.msra.mxu0 0
    %865 = vmatprep.subr.bf16.mxu0 0
    %866 = vmatpush1.bf16.msra.mxu0 0
    %867 = vmatprep.mubr.bf16.mxu0 0
    %868 = vmatmul.mubr.bf16.gmra.mrb[0].mxu0 %v830
    %v869 = vpop.f32.mrb[0].mxu0
    %v870 = vadd.f32 %v785, %v869
    %v871 = vpop.f32.mrb[0].mxu0
    %v872 = vpop.f32.mrb[0].mxu0
    %v873 = vadd.f32 %v788, %v872
    %v874 = vpop.f32.mrb[0].mxu0
    %875 = vmatprep.mubr.bf16.mxu0 0
    %876 = vmatmul.mubr.bf16.gmra.mrb[0].mxu0 %v833
    %v877 = vpop.f32.mrb[0].mxu0
    %v878 = vadd.f32 %v793, %v877
    %v879 = vpop.f32.mrb[0].mxu0
    %v880 = vpop.f32.mrb[0].mxu0
    %v881 = vadd.f32 %v796, %v880
    %v882 = vpop.f32.mrb[0].mxu0
    %883 = vdwg.mxu0
    %v884 = vld [vmem:[#allocation2 + $0xa8] sm:$0xf]
    %v885 = vld [vmem:[#allocation2 + $0xac] sm:$0xf]
    %v886 = vld [vmem:[#allocation2 + $0xb0] sm:$0xf]
    %v887 = vld [vmem:[#allocation2 + $0xb4] sm:$0xf]
    %v888 = vld [vmem:[#allocation2 + $0xb8] sm:$0xf]
    %v889 = vld [vmem:[#allocation2 + $0xbc] sm:$0xf]
    %v890 = vld [vmem:[#allocation2 + $0xc0] sm:$0xf]
    %v891 = vld [vmem:[#allocation2 + $0xc4] sm:$0xf]
    %v892 = vld [vmem:[#allocation2 + $0xc8] sm:$0xf]
    %v893 = vld [vmem:[#allocation2 + $0xcc] sm:$0xf]
    %v904 = vunpack.c.l.b16 %v884
    %v905 = vunpack.c.l.b16 %v885
    %v906 = vunpack.c.l.b16 %v886
    %v907 = vunpack.c.l.b16 %v887
    %v908 = vunpack.c.l.b16 %v888
    %v909 = vunpack.c.l.b16 %v889
    %v910 = vunpack.c.l.b16 %v890
    %v911 = vunpack.c.l.b16 %v891
    %v912 = vunpack.c.l.b16 %v892
    %v913 = vunpack.c.l.b16 %v893
    %v914 = vpack.c.b16 %v905, %v904
    %v915 = vpack.c.b16 %v907, %v906
    %v916 = vpack.c.b16 %v909, %v908
    %v917 = vpack.c.b16 %v911, %v910
    %v918 = vpack.c.b16 %v913, %v912
    %924 = vmatprep.subr.bf16.mxu0 0
    %925 = vmatpush1.bf16.msra.mxu0 %v914
    %926 = vmatprep.subr.bf16.mxu0 0
    %927 = vmatpush1.bf16.msra.mxu0 %v915
    %928 = vmatprep.subr.bf16.mxu0 0
    %929 = vmatpush1.bf16.msra.mxu0 %v916
    %930 = vmatprep.subr.bf16.mxu0 0
    %931 = vmatpush1.bf16.msra.mxu0 %v917
    %932 = vmatprep.subr.bf16.mxu0 0
    %933 = vmatpush1.bf16.msra.mxu0 %v918
    %934 = vmatprep.subr.bf16.mxu0 0
    %935 = vmatpush1.bf16.msra.mxu0 0
    %936 = vmatprep.subr.bf16.mxu0 0
    %937 = vmatpush1.bf16.msra.mxu0 0
    %938 = vmatprep.subr.bf16.mxu0 0
    %939 = vmatpush1.bf16.msra.mxu0 0
    %940 = vmatprep.subr.bf16.mxu0 0
    %941 = vmatpush1.bf16.msra.mxu0 0
    %942 = vmatprep.subr.bf16.mxu0 0
    %943 = vmatpush1.bf16.msra.mxu0 0
    %944 = vmatprep.subr.bf16.mxu0 0
    %945 = vmatpush1.bf16.msra.mxu0 0
    %946 = vmatprep.subr.bf16.mxu0 0
    %947 = vmatpush1.bf16.msra.mxu0 0
    %948 = vmatprep.subr.bf16.mxu0 0
    %949 = vmatpush1.bf16.msra.mxu0 0
    %950 = vmatprep.subr.bf16.mxu0 0
    %951 = vmatpush1.bf16.msra.mxu0 0
    %952 = vmatprep.subr.bf16.mxu0 0
    %953 = vmatpush1.bf16.msra.mxu0 0
    %954 = vmatprep.subr.bf16.mxu0 0
    %955 = vmatpush1.bf16.msra.mxu0 0
    %956 = vmatprep.mubr.bf16.mxu0 0
    %957 = vmatmul.mubr.bf16.gmra.mrb[0].mxu0 %v745
    %v958 = vpop.f32.mrb[0].mxu0
    %v959 = vadd.f32 0.0, %v958
    %v960 = vpop.f32.mrb[0].mxu0
    %v961 = vpop.f32.mrb[0].mxu0
    %v962 = vadd.f32 0.0, %v961
    %v963 = vpop.f32.mrb[0].mxu0
    %964 = vmatprep.mubr.bf16.mxu0 0
    %965 = vmatmul.mubr.bf16.gmra.mrb[0].mxu0 %v748
    %v966 = vpop.f32.mrb[0].mxu0
    %v967 = vadd.f32 0.0, %v966
    %v968 = vpop.f32.mrb[0].mxu0
    %v969 = vpop.f32.mrb[0].mxu0
    %v970 = vadd.f32 0.0, %v969
    %v971 = vpop.f32.mrb[0].mxu0
    %972 = vdwg.mxu0
    %v983 = vunpack.c.l.b16 %v691
    %v984 = vunpack.c.l.b16 %v692
    %v985 = vunpack.c.l.b16 %v693
    %v986 = vunpack.c.l.b16 %v694
    %v987 = vunpack.c.l.b16 %v695
    %v988 = vunpack.c.l.b16 %v696
    %v989 = vunpack.c.l.b16 %v697
    %v990 = vunpack.c.l.b16 %v698
    %v991 = vunpack.c.l.b16 %v699
    %v992 = vunpack.c.l.b16 %v700
    %v993 = vpack.c.b16 %v984, %v983
    %v994 = vpack.c.b16 %v986, %v985
    %v995 = vpack.c.b16 %v988, %v987
    %v996 = vpack.c.b16 %v990, %v989
    %v997 = vpack.c.b16 %v992, %v991
    %1003 = vmatprep.subr.bf16.mxu0 0
    %1004 = vmatpush1.bf16.msra.mxu0 %v993
    %1005 = vmatprep.subr.bf16.mxu0 0
    %1006 = vmatpush1.bf16.msra.mxu0 %v994
    %1007 = vmatprep.subr.bf16.mxu0 0
    %1008 = vmatpush1.bf16.msra.mxu0 %v995
    %1009 = vmatprep.subr.bf16.mxu0 0
    %1010 = vmatpush1.bf16.msra.mxu0 %v996
    %1011 = vmatprep.subr.bf16.mxu0 0
    %1012 = vmatpush1.bf16.msra.mxu0 %v997
    %1013 = vmatprep.subr.bf16.mxu0 0
    %1014 = vmatpush1.bf16.msra.mxu0 0
    %1015 = vmatprep.subr.bf16.mxu0 0
    %1016 = vmatpush1.bf16.msra.mxu0 0
    %1017 = vmatprep.subr.bf16.mxu0 0
    %1018 = vmatpush1.bf16.msra.mxu0 0
    %1019 = vmatprep.subr.bf16.mxu0 0
    %1020 = vmatpush1.bf16.msra.mxu0 0
    %1021 = vmatprep.subr.bf16.mxu0 0
    %1022 = vmatpush1.bf16.msra.mxu0 0
    %1023 = vmatprep.subr.bf16.mxu0 0
    %1024 = vmatpush1.bf16.msra.mxu0 0
    %1025 = vmatprep.subr.bf16.mxu0 0
    %1026 = vmatpush1.bf16.msra.mxu0 0
    %1027 = vmatprep.subr.bf16.mxu0 0
    %1028 = vmatpush1.bf16.msra.mxu0 0
    %1029 = vmatprep.subr.bf16.mxu0 0
    %1030 = vmatpush1.bf16.msra.mxu0 0
    %1031 = vmatprep.subr.bf16.mxu0 0
    %1032 = vmatpush1.bf16.msra.mxu0 0
    %1033 = vmatprep.subr.bf16.mxu0 0
    %1034 = vmatpush1.bf16.msra.mxu0 0
    %1035 = vmatprep.mubr.bf16.mxu0 0
    %1036 = vmatmul.mubr.bf16.gmra.mrb[0].mxu0 %v830
    %v1037 = vpop.f32.mrb[0].mxu0
    %v1038 = vadd.f32 %v959, %v1037
    %v1039 = vpop.f32.mrb[0].mxu0
    %v1040 = vpop.f32.mrb[0].mxu0
    %v1041 = vadd.f32 %v962, %v1040
    %v1042 = vpop.f32.mrb[0].mxu0
    %1043 = vmatprep.mubr.bf16.mxu0 0
    %1044 = vmatmul.mubr.bf16.gmra.mrb[0].mxu0 %v833
    %v1045 = vpop.f32.mrb[0].mxu0
    %v1046 = vadd.f32 %v967, %v1045
    %v1047 = vpop.f32.mrb[0].mxu0
    %v1048 = vpop.f32.mrb[0].mxu0
    %v1049 = vadd.f32 %v970, %v1048
    %v1050 = vpop.f32.mrb[0].mxu0
    %1051 = vdwg.mxu0
    %v1052 = vmax.f32 %v870, %v1038
    %v1053 = vmax.f32 %v873, %v1041
    %v1054 = vmax.f32 %v878, %v1046
    %v1055 = vmax.f32 %v881, %v1049
    %v1056 = vld [vmem:[#allocation2 + $0x218] sm:$0xf]
    %v1057 = vunpack.c.l.bf16 %v1056
    %v1058 = vlaneseq
    %v1059 = vshrl.u32 %v1058, 7
    %v1060 = vsub.s32 0, %v1059
    %v1061 = vrot.slane %v1057, %v1060
    %v1062 = vadd.f32 %v1052, %v1061
    %v1063 = vadd.f32 %v1053, %v1061
    %v1064 = vadd.f32 %v1054, %v1061
    %v1065 = vadd.f32 %v1055, %v1061
    %v1066 = vmax.f32 %v1062, 0.0
    %v1067 = vmax.f32 %v1063, 0.0
    %v1068 = vmax.f32 %v1064, 0.0
    %v1069 = vmax.f32 %v1065, 0.0
    %v1070 = vmax.f32 %v1066, %v1067
    %v1071 = vmax.f32 %v1068, %v1069
    %v1072 = vpack.c.bf16 %v1070, %v1070
    %v1073 = vpack.c.bf16 %v1071, %v1071
    %v1074 = vld [vmem:[#allocation2 + $0xd0] sm:$0xf]
    %v1075 = vld [vmem:[#allocation2 + $0xd4] sm:$0xf]
    %v1076 = vld [vmem:[#allocation2 + $0xd8] sm:$0xf]
    %v1077 = vld [vmem:[#allocation2 + $0xdc] sm:$0xf]
    %v1078 = vld [vmem:[#allocation2 + $0xe0] sm:$0xf]
    %v1079 = vld [vmem:[#allocation2 + $0xe4] sm:$0xf]
    %v1080 = vld [vmem:[#allocation2 + $0xe8] sm:$0xf]
    %v1081 = vld [vmem:[#allocation2 + $0xec] sm:$0xf]
    %v1082 = vld [vmem:[#allocation2 + $0xf0] sm:$0xf]
    %v1083 = vld [vmem:[#allocation2 + $0xf4] sm:$0xf]
    %v1084 = vld [vmem:[#allocation2 + $0xf8] sm:$0xf]
    %v1085 = vld [vmem:[#allocation2 + $0xfc] sm:$0xf]
    %v1086 = vld [vmem:[#allocation2 + $0x100] sm:$0xf]
    %v1087 = vld [vmem:[#allocation2 + $0x104] sm:$0xf]
    %v1088 = vld [vmem:[#allocation2 + $0x108] sm:$0xf]
    %v1089 = vld [vmem:[#allocation2 + $0x10c] sm:$0xf]
    %v1098 = vunpack.c.l.b16 %v1082
    %v1099 = vunpack.c.l.b16 %v1083
    %v1100 = vunpack.c.l.b16 %v1084
    %v1101 = vunpack.c.l.b16 %v1085
    %v1102 = vunpack.c.l.b16 %v1086
    %v1103 = vunpack.c.l.b16 %v1087
    %v1104 = vunpack.c.l.b16 %v1088
    %v1105 = vunpack.c.l.b16 %v1089
    %v1106 = vpack.c.b16 %v1099, %v1098
    %v1107 = vpack.c.b16 %v1101, %v1100
    %v1108 = vpack.c.b16 %v1103, %v1102
    %v1109 = vpack.c.b16 %v1105, %v1104
    %vm1114 = vcmask 523264
    %v1116 = vsel %vm1114, %v1073, 0
    %1118 = vmatprep.subr.bf16.mxu0 0
    %1119 = vmatpush1.bf16.msra.mxu0 %v1106
    %1120 = vmatprep.subr.bf16.mxu0 0
    %1121 = vmatpush1.bf16.msra.mxu0 %v1107
    %1122 = vmatprep.subr.bf16.mxu0 0
    %1123 = vmatpush1.bf16.msra.mxu0 %v1108
    %1124 = vmatprep.subr.bf16.mxu0 0
    %1125 = vmatpush1.bf16.msra.mxu0 %v1109
    %1126 = vmatprep.subr.bf16.mxu0 0
    %1127 = vmatpush1.bf16.msra.mxu0 0
    %1128 = vmatprep.subr.bf16.mxu0 0
    %1129 = vmatpush1.bf16.msra.mxu0 0
    %1130 = vmatprep.subr.bf16.mxu0 0
    %1131 = vmatpush1.bf16.msra.mxu0 0
    %1132 = vmatprep.subr.bf16.mxu0 0
    %1133 = vmatpush1.bf16.msra.mxu0 0
    %1134 = vmatprep.subr.bf16.mxu0 0
    %1135 = vmatpush1.bf16.msra.mxu0 0
    %1136 = vmatprep.subr.bf16.mxu0 0
    %1137 = vmatpush1.bf16.msra.mxu0 0
    %1138 = vmatprep.subr.bf16.mxu0 0
    %1139 = vmatpush1.bf16.msra.mxu0 0
    %1140 = vmatprep.subr.bf16.mxu0 0
    %1141 = vmatpush1.bf16.msra.mxu0 0
    %1142 = vmatprep.subr.bf16.mxu0 0
    %1143 = vmatpush1.bf16.msra.mxu0 0
    %1144 = vmatprep.subr.bf16.mxu0 0
    %1145 = vmatpush1.bf16.msra.mxu0 0
    %1146 = vmatprep.subr.bf16.mxu0 0
    %1147 = vmatpush1.bf16.msra.mxu0 0
    %1148 = vmatprep.subr.bf16.mxu0 0
    %1149 = vmatpush1.bf16.msra.mxu0 0
    %1150 = vmatprep.mubr.bf16.mxu0 0
    %1151 = vmatmul.mubr.bf16.gmra.mrb[0].mxu0 %v1116
    %v1152 = vpop.f32.mrb[0].mxu0
    %v1153 = vadd.f32 0.0, %v1152
    %v1154 = vpop.f32.mrb[0].mxu0
    %v1155 = vpop.f32.mrb[0].mxu0
    %v1156 = vpop.f32.mrb[0].mxu0
    %1157 = vdwg.mxu0
    %v1166 = vunpack.c.l.b16 %v1074
    %v1167 = vunpack.c.l.b16 %v1075
    %v1168 = vunpack.c.l.b16 %v1076
    %v1169 = vunpack.c.l.b16 %v1077
    %v1170 = vunpack.c.l.b16 %v1078
    %v1171 = vunpack.c.l.b16 %v1079
    %v1172 = vunpack.c.l.b16 %v1080
    %v1173 = vunpack.c.l.b16 %v1081
    %v1174 = vpack.c.b16 %v1167, %v1166
    %v1175 = vpack.c.b16 %v1169, %v1168
    %v1176 = vpack.c.b16 %v1171, %v1170
    %v1177 = vpack.c.b16 %v1173, %v1172
    %v1183 = vsel %vm1114, %v1072, 0
    %1185 = vmatprep.subr.bf16.mxu0 0
    %1186 = vmatpush1.bf16.msra.mxu0 %v1174
    %1187 = vmatprep.subr.bf16.mxu0 0
    %1188 = vmatpush1.bf16.msra.mxu0 %v1175
    %1189 = vmatprep.subr.bf16.mxu0 0
    %1190 = vmatpush1.bf16.msra.mxu0 %v1176
    %1191 = vmatprep.subr.bf16.mxu0 0
    %1192 = vmatpush1.bf16.msra.mxu0 %v1177
    %1193 = vmatprep.subr.bf16.mxu0 0
    %1194 = vmatpush1.bf16.msra.mxu0 0
    %1195 = vmatprep.subr.bf16.mxu0 0
    %1196 = vmatpush1.bf16.msra.mxu0 0
    %1197 = vmatprep.subr.bf16.mxu0 0
    %1198 = vmatpush1.bf16.msra.mxu0 0
    %1199 = vmatprep.subr.bf16.mxu0 0
    %1200 = vmatpush1.bf16.msra.mxu0 0
    %1201 = vmatprep.subr.bf16.mxu0 0
    %1202 = vmatpush1.bf16.msra.mxu0 0
    %1203 = vmatprep.subr.bf16.mxu0 0
    %1204 = vmatpush1.bf16.msra.mxu0 0
    %1205 = vmatprep.subr.bf16.mxu0 0
    %1206 = vmatpush1.bf16.msra.mxu0 0
    %1207 = vmatprep.subr.bf16.mxu0 0
    %1208 = vmatpush1.bf16.msra.mxu0 0
    %1209 = vmatprep.subr.bf16.mxu0 0
    %1210 = vmatpush1.bf16.msra.mxu0 0
    %1211 = vmatprep.subr.bf16.mxu0 0
    %1212 = vmatpush1.bf16.msra.mxu0 0
    %1213 = vmatprep.subr.bf16.mxu0 0
    %1214 = vmatpush1.bf16.msra.mxu0 0
    %1215 = vmatprep.subr.bf16.mxu0 0
    %1216 = vmatpush1.bf16.msra.mxu0 0
    %1217 = vmatprep.mubr.bf16.mxu0 0
    %1218 = vmatmul.mubr.bf16.gmra.mrb[0].mxu0 %v1183
    %v1219 = vpop.f32.mrb[0].mxu0
    %v1220 = vadd.f32 %v1153, %v1219
    %v1221 = vpop.f32.mrb[0].mxu0
    %v1222 = vpop.f32.mrb[0].mxu0
    %v1223 = vpop.f32.mrb[0].mxu0
    %1224 = vdwg.mxu0
    %v1225 = vld [vmem:[#allocation2 + $0x220] sm:$0xf]
    %v1226 = vunpack.c.l.bf16 %v1225
    %v1227 = vlaneseq
    %v1228 = vshrl.u32 %v1227, 7
    %v1229 = vsub.s32 0, %v1228
    %v1230 = vrot.slane %v1226, %v1229
    %v1231 = vadd.f32 %v1220, %v1230
    %v1232 = vld [vmem:[#allocation2 + $0x110] sm:$0xf]
    %v1233 = vld [vmem:[#allocation2 + $0x114] sm:$0xf]
    %v1234 = vld [vmem:[#allocation2 + $0x118] sm:$0xf]
    %v1235 = vld [vmem:[#allocation2 + $0x11c] sm:$0xf]
    %v1236 = vld [vmem:[#allocation2 + $0x120] sm:$0xf]
    %v1237 = vld [vmem:[#allocation2 + $0x124] sm:$0xf]
    %v1238 = vld [vmem:[#allocation2 + $0x128] sm:$0xf]
    %v1239 = vld [vmem:[#allocation2 + $0x12c] sm:$0xf]
    %v1240 = vld [vmem:[#allocation2 + $0x130] sm:$0xf]
    %v1241 = vld [vmem:[#allocation2 + $0x134] sm:$0xf]
    %v1242 = vld [vmem:[#allocation2 + $0x138] sm:$0xf]
    %v1243 = vld [vmem:[#allocation2 + $0x13c] sm:$0xf]
    %v1244 = vld [vmem:[#allocation2 + $0x140] sm:$0xf]
    %v1245 = vld [vmem:[#allocation2 + $0x144] sm:$0xf]
    %v1246 = vld [vmem:[#allocation2 + $0x148] sm:$0xf]
    %v1247 = vld [vmem:[#allocation2 + $0x14c] sm:$0xf]
    %v1256 = vunpack.c.l.b16 %v1240
    %v1257 = vunpack.c.l.b16 %v1241
    %v1258 = vunpack.c.l.b16 %v1242
    %v1259 = vunpack.c.l.b16 %v1243
    %v1260 = vunpack.c.l.b16 %v1244
    %v1261 = vunpack.c.l.b16 %v1245
    %v1262 = vunpack.c.l.b16 %v1246
    %v1263 = vunpack.c.l.b16 %v1247
    %v1264 = vpack.c.b16 %v1257, %v1256
    %v1265 = vpack.c.b16 %v1259, %v1258
    %v1266 = vpack.c.b16 %v1261, %v1260
    %v1267 = vpack.c.b16 %v1263, %v1262
    %1272 = vmatprep.subr.bf16.mxu0 0
    %1273 = vmatpush1.bf16.msra.mxu0 %v1264
    %1274 = vmatprep.subr.bf16.mxu0 0
    %1275 = vmatpush1.bf16.msra.mxu0 %v1265
    %1276 = vmatprep.subr.bf16.mxu0 0
    %1277 = vmatpush1.bf16.msra.mxu0 %v1266
    %1278 = vmatprep.subr.bf16.mxu0 0
    %1279 = vmatpush1.bf16.msra.mxu0 %v1267
    %1280 = vmatprep.subr.bf16.mxu0 0
    %1281 = vmatpush1.bf16.msra.mxu0 0
    %1282 = vmatprep.subr.bf16.mxu0 0
    %1283 = vmatpush1.bf16.msra.mxu0 0
    %1284 = vmatprep.subr.bf16.mxu0 0
    %1285 = vmatpush1.bf16.msra.mxu0 0
    %1286 = vmatprep.subr.bf16.mxu0 0
    %1287 = vmatpush1.bf16.msra.mxu0 0
    %1288 = vmatprep.subr.bf16.mxu0 0
    %1289 = vmatpush1.bf16.msra.mxu0 0
    %1290 = vmatprep.subr.bf16.mxu0 0
    %1291 = vmatpush1.bf16.msra.mxu0 0
    %1292 = vmatprep.subr.bf16.mxu0 0
    %1293 = vmatpush1.bf16.msra.mxu0 0
    %1294 = vmatprep.subr.bf16.mxu0 0
    %1295 = vmatpush1.bf16.msra.mxu0 0
    %1296 = vmatprep.subr.bf16.mxu0 0
    %1297 = vmatpush1.bf16.msra.mxu0 0
    %1298 = vmatprep.subr.bf16.mxu0 0
    %1299 = vmatpush1.bf16.msra.mxu0 0
    %1300 = vmatprep.subr.bf16.mxu0 0
    %1301 = vmatpush1.bf16.msra.mxu0 0
    %1302 = vmatprep.subr.bf16.mxu0 0
    %1303 = vmatpush1.bf16.msra.mxu0 0
    %1304 = vmatprep.mubr.bf16.mxu0 0
    %1305 = vmatmul.mubr.bf16.gmra.mrb[0].mxu0 %v1116
    %v1306 = vpop.f32.mrb[0].mxu0
    %v1307 = vadd.f32 0.0, %v1306
    %v1308 = vpop.f32.mrb[0].mxu0
    %v1309 = vpop.f32.mrb[0].mxu0
    %v1310 = vpop.f32.mrb[0].mxu0
    %1311 = vdwg.mxu0
    %v1320 = vunpack.c.l.b16 %v1232
    %v1321 = vunpack.c.l.b16 %v1233
    %v1322 = vunpack.c.l.b16 %v1234
    %v1323 = vunpack.c.l.b16 %v1235
    %v1324 = vunpack.c.l.b16 %v1236
    %v1325 = vunpack.c.l.b16 %v1237
    %v1326 = vunpack.c.l.b16 %v1238
    %v1327 = vunpack.c.l.b16 %v1239
    %v1328 = vpack.c.b16 %v1321, %v1320
    %v1329 = vpack.c.b16 %v1323, %v1322
    %v1330 = vpack.c.b16 %v1325, %v1324
    %v1331 = vpack.c.b16 %v1327, %v1326
    %1336 = vmatprep.subr.bf16.mxu0 0
    %1337 = vmatpush1.bf16.msra.mxu0 %v1328
    %1338 = vmatprep.subr.bf16.mxu0 0
    %1339 = vmatpush1.bf16.msra.mxu0 %v1329
    %1340 = vmatprep.subr.bf16.mxu0 0
    %1341 = vmatpush1.bf16.msra.mxu0 %v1330
    %1342 = vmatprep.subr.bf16.mxu0 0
    %1343 = vmatpush1.bf16.msra.mxu0 %v1331
    %1344 = vmatprep.subr.bf16.mxu0 0
    %1345 = vmatpush1.bf16.msra.mxu0 0
    %1346 = vmatprep.subr.bf16.mxu0 0
    %1347 = vmatpush1.bf16.msra.mxu0 0
    %1348 = vmatprep.subr.bf16.mxu0 0
    %1349 = vmatpush1.bf16.msra.mxu0 0
    %1350 = vmatprep.subr.bf16.mxu0 0
    %1351 = vmatpush1.bf16.msra.mxu0 0
    %1352 = vmatprep.subr.bf16.mxu0 0
    %1353 = vmatpush1.bf16.msra.mxu0 0
    %1354 = vmatprep.subr.bf16.mxu0 0
    %1355 = vmatpush1.bf16.msra.mxu0 0
    %1356 = vmatprep.subr.bf16.mxu0 0
    %1357 = vmatpush1.bf16.msra.mxu0 0
    %1358 = vmatprep.subr.bf16.mxu0 0
    %1359 = vmatpush1.bf16.msra.mxu0 0
    %1360 = vmatprep.subr.bf16.mxu0 0
    %1361 = vmatpush1.bf16.msra.mxu0 0
    %1362 = vmatprep.subr.bf16.mxu0 0
    %1363 = vmatpush1.bf16.msra.mxu0 0
    %1364 = vmatprep.subr.bf16.mxu0 0
    %1365 = vmatpush1.bf16.msra.mxu0 0
    %1366 = vmatprep.subr.bf16.mxu0 0
    %1367 = vmatpush1.bf16.msra.mxu0 0
    %1368 = vmatprep.mubr.bf16.mxu0 0
    %1369 = vmatmul.mubr.bf16.gmra.mrb[0].mxu0 %v1183
    %v1370 = vpop.f32.mrb[0].mxu0
    %v1371 = vadd.f32 %v1307, %v1370
    %v1372 = vpop.f32.mrb[0].mxu0
    %v1373 = vpop.f32.mrb[0].mxu0
    %v1374 = vpop.f32.mrb[0].mxu0
    %1375 = vdwg.mxu0
    %v1376 = vld [vmem:[#allocation2 + $0x228] sm:$0xf]
    %v1377 = vunpack.c.l.bf16 %v1376
    %v1378 = vlaneseq
    %v1379 = vshrl.u32 %v1378, 7
    %v1380 = vsub.s32 0, %v1379
    %v1381 = vrot.slane %v1377, %v1380
    %v1382 = vadd.f32 %v1371, %v1381
    %v1383 = vmax.f32 %v1231, 0.0
    %v1384 = vmax.f32 %v1382, 0.0
    %v1385 = vpack.c.bf16 %v1383, %v1383
    %v1386 = vld [vmem:[#allocation2 + $0x150] sm:$0xf]
    %v1387 = vld [vmem:[#allocation2 + $0x154] sm:$0xf]
    %v1388 = vld [vmem:[#allocation2 + $0x158] sm:$0xf]
    %v1389 = vld [vmem:[#allocation2 + $0x15c] sm:$0xf]
    %v1390 = vld [vmem:[#allocation2 + $0x160] sm:$0xf]
    %v1391 = vld [vmem:[#allocation2 + $0x164] sm:$0xf]
    %v1392 = vld [vmem:[#allocation2 + $0x168] sm:$0xf]
    %v1393 = vld [vmem:[#allocation2 + $0x16c] sm:$0xf]
    %v1394 = vld [vmem:[#allocation2 + $0x170] sm:$0xf]
    %v1395 = vld [vmem:[#allocation2 + $0x174] sm:$0xf]
    %v1396 = vld [vmem:[#allocation2 + $0x178] sm:$0xf]
    %v1397 = vld [vmem:[#allocation2 + $0x17c] sm:$0xf]
    %v1398 = vld [vmem:[#allocation2 + $0x180] sm:$0xf]
    %v1399 = vld [vmem:[#allocation2 + $0x184] sm:$0xf]
    %v1400 = vld [vmem:[#allocation2 + $0x188] sm:$0xf]
    %v1401 = vld [vmem:[#allocation2 + $0x18c] sm:$0xf]
    %v1402 = vpack.c.bf16 %v1384, %v1384
    %v1403 = vld [vmem:[#allocation2 + $0x190] sm:$0xf]
    %v1404 = vld [vmem:[#allocation2 + $0x194] sm:$0xf]
    %v1405 = vld [vmem:[#allocation2 + $0x198] sm:$0xf]
    %v1406 = vld [vmem:[#allocation2 + $0x19c] sm:$0xf]
    %v1407 = vld [vmem:[#allocation2 + $0x1a0] sm:$0xf]
    %v1408 = vld [vmem:[#allocation2 + $0x1a4] sm:$0xf]
    %v1409 = vld [vmem:[#allocation2 + $0x1a8] sm:$0xf]
    %v1410 = vld [vmem:[#allocation2 + $0x1ac] sm:$0xf]
    %v1411 = vld [vmem:[#allocation2 + $0x1b0] sm:$0xf]
    %v1412 = vld [vmem:[#allocation2 + $0x1b4] sm:$0xf]
    %v1413 = vld [vmem:[#allocation2 + $0x1b8] sm:$0xf]
    %v1414 = vld [vmem:[#allocation2 + $0x1bc] sm:$0xf]
    %v1415 = vld [vmem:[#allocation2 + $0x1c0] sm:$0xf]
    %v1416 = vld [vmem:[#allocation2 + $0x1c4] sm:$0xf]
    %v1417 = vld [vmem:[#allocation2 + $0x1c8] sm:$0xf]
    %v1418 = vld [vmem:[#allocation2 + $0x1cc] sm:$0xf]
    %v1435 = vunpack.c.l.b16 %v1403
    %v1436 = vunpack.c.l.b16 %v1404
    %v1437 = vunpack.c.l.b16 %v1405
    %v1438 = vunpack.c.l.b16 %v1406
    %v1439 = vunpack.c.l.b16 %v1407
    %v1440 = vunpack.c.l.b16 %v1408
    %v1441 = vunpack.c.l.b16 %v1409
    %v1442 = vunpack.c.l.b16 %v1410
    %v1443 = vunpack.c.l.b16 %v1411
    %v1444 = vunpack.c.l.b16 %v1412
    %v1445 = vunpack.c.l.b16 %v1413
    %v1446 = vunpack.c.l.b16 %v1414
    %v1447 = vunpack.c.l.b16 %v1415
    %v1448 = vunpack.c.l.b16 %v1416
    %v1449 = vunpack.c.l.b16 %v1417
    %v1450 = vunpack.c.l.b16 %v1418
    %v1451 = vpack.c.b16 %v1436, %v1435
    %v1452 = vpack.c.b16 %v1438, %v1437
    %v1453 = vpack.c.b16 %v1440, %v1439
    %v1454 = vpack.c.b16 %v1442, %v1441
    %v1455 = vpack.c.b16 %v1444, %v1443
    %v1456 = vpack.c.b16 %v1446, %v1445
    %v1457 = vpack.c.b16 %v1448, %v1447
    %v1458 = vpack.c.b16 %v1450, %v1449
    %1467 = vmatprep.subr.bf16.mxu0 0
    %1468 = vmatpush1.bf16.msra.mxu0 %v1451
    %1469 = vmatprep.subr.bf16.mxu0 0
    %1470 = vmatpush1.bf16.msra.mxu0 %v1452
    %1471 = vmatprep.subr.bf16.mxu0 0
    %1472 = vmatpush1.bf16.msra.mxu0 %v1453
    %1473 = vmatprep.subr.bf16.mxu0 0
    %1474 = vmatpush1.bf16.msra.mxu0 %v1454
    %1475 = vmatprep.subr.bf16.mxu0 0
    %1476 = vmatpush1.bf16.msra.mxu0 %v1455
    %1477 = vmatprep.subr.bf16.mxu0 0
    %1478 = vmatpush1.bf16.msra.mxu0 %v1456
    %1479 = vmatprep.subr.bf16.mxu0 0
    %1480 = vmatpush1.bf16.msra.mxu0 %v1457
    %1481 = vmatprep.subr.bf16.mxu0 0
    %1482 = vmatpush1.bf16.msra.mxu0 %v1458
    %1483 = vmatprep.subr.bf16.mxu0 0
    %1484 = vmatpush1.bf16.msra.mxu0 0
    %1485 = vmatprep.subr.bf16.mxu0 0
    %1486 = vmatpush1.bf16.msra.mxu0 0
    %1487 = vmatprep.subr.bf16.mxu0 0
    %1488 = vmatpush1.bf16.msra.mxu0 0
    %1489 = vmatprep.subr.bf16.mxu0 0
    %1490 = vmatpush1.bf16.msra.mxu0 0
    %1491 = vmatprep.subr.bf16.mxu0 0
    %1492 = vmatpush1.bf16.msra.mxu0 0
    %1493 = vmatprep.subr.bf16.mxu0 0
    %1494 = vmatpush1.bf16.msra.mxu0 0
    %1495 = vmatprep.subr.bf16.mxu0 0
    %1496 = vmatpush1.bf16.msra.mxu0 0
    %1497 = vmatprep.subr.bf16.mxu0 0
    %1498 = vmatpush1.bf16.msra.mxu0 0
    %1499 = vmatprep.mubr.bf16.mxu0 0
    %1500 = vmatmul.mubr.bf16.gmra.mrb[0].mxu0 %v1402
    %v1501 = vpop.f32.mrb[0].mxu0
    %v1502 = vadd.f32 0.0, %v1501
    %v1503 = vpop.f32.mrb[0].mxu0
    %v1504 = vpop.f32.mrb[0].mxu0
    %v1505 = vpop.f32.mrb[0].mxu0
    %1506 = vdwg.mxu0
    %v1523 = vunpack.c.l.b16 %v1386
    %v1524 = vunpack.c.l.b16 %v1387
    %v1525 = vunpack.c.l.b16 %v1388
    %v1526 = vunpack.c.l.b16 %v1389
    %v1527 = vunpack.c.l.b16 %v1390
    %v1528 = vunpack.c.l.b16 %v1391
    %v1529 = vunpack.c.l.b16 %v1392
    %v1530 = vunpack.c.l.b16 %v1393
    %v1531 = vunpack.c.l.b16 %v1394
    %v1532 = vunpack.c.l.b16 %v1395
    %v1533 = vunpack.c.l.b16 %v1396
    %v1534 = vunpack.c.l.b16 %v1397
    %v1535 = vunpack.c.l.b16 %v1398
    %v1536 = vunpack.c.l.b16 %v1399
    %v1537 = vunpack.c.l.b16 %v1400
    %v1538 = vunpack.c.l.b16 %v1401
    %v1539 = vpack.c.b16 %v1524, %v1523
    %v1540 = vpack.c.b16 %v1526, %v1525
    %v1541 = vpack.c.b16 %v1528, %v1527
    %v1542 = vpack.c.b16 %v1530, %v1529
    %v1543 = vpack.c.b16 %v1532, %v1531
    %v1544 = vpack.c.b16 %v1534, %v1533
    %v1545 = vpack.c.b16 %v1536, %v1535
    %v1546 = vpack.c.b16 %v1538, %v1537
    %1555 = vmatprep.subr.bf16.mxu0 0
    %1556 = vmatpush1.bf16.msra.mxu0 %v1539
    %1557 = vmatprep.subr.bf16.mxu0 0
    %1558 = vmatpush1.bf16.msra.mxu0 %v1540
    %1559 = vmatprep.subr.bf16.mxu0 0
    %1560 = vmatpush1.bf16.msra.mxu0 %v1541
    %1561 = vmatprep.subr.bf16.mxu0 0
    %1562 = vmatpush1.bf16.msra.mxu0 %v1542
    %1563 = vmatprep.subr.bf16.mxu0 0
    %1564 = vmatpush1.bf16.msra.mxu0 %v1543
    %1565 = vmatprep.subr.bf16.mxu0 0
    %1566 = vmatpush1.bf16.msra.mxu0 %v1544
    %1567 = vmatprep.subr.bf16.mxu0 0
    %1568 = vmatpush1.bf16.msra.mxu0 %v1545
    %1569 = vmatprep.subr.bf16.mxu0 0
    %1570 = vmatpush1.bf16.msra.mxu0 %v1546
    %1571 = vmatprep.subr.bf16.mxu0 0
    %1572 = vmatpush1.bf16.msra.mxu0 0
    %1573 = vmatprep.subr.bf16.mxu0 0
    %1574 = vmatpush1.bf16.msra.mxu0 0
    %1575 = vmatprep.subr.bf16.mxu0 0
    %1576 = vmatpush1.bf16.msra.mxu0 0
    %1577 = vmatprep.subr.bf16.mxu0 0
    %1578 = vmatpush1.bf16.msra.mxu0 0
    %1579 = vmatprep.subr.bf16.mxu0 0
    %1580 = vmatpush1.bf16.msra.mxu0 0
    %1581 = vmatprep.subr.bf16.mxu0 0
    %1582 = vmatpush1.bf16.msra.mxu0 0
    %1583 = vmatprep.subr.bf16.mxu0 0
    %1584 = vmatpush1.bf16.msra.mxu0 0
    %1585 = vmatprep.subr.bf16.mxu0 0
    %1586 = vmatpush1.bf16.msra.mxu0 0
    %1587 = vmatprep.mubr.bf16.mxu0 0
    %1588 = vmatmul.mubr.bf16.gmra.mrb[0].mxu0 %v1385
    %v1589 = vpop.f32.mrb[0].mxu0
    %v1590 = vadd.f32 %v1502, %v1589
    %v1591 = vpop.f32.mrb[0].mxu0
    %v1592 = vpop.f32.mrb[0].mxu0
    %v1593 = vpop.f32.mrb[0].mxu0
    %1594 = vdwg.mxu0
    %v1595 = vld [vmem:[#allocation2 + $0x230] sm:$0xf]
    %v1596 = vunpack.c.l.bf16 %v1595
    %v1597 = vlaneseq
    %v1598 = vshrl.u32 %v1597, 7
    %v1599 = vsub.s32 0, %v1598
    %v1600 = vrot.slane %v1596, %v1599
    %v1601 = vadd.f32 %v1590, %v1600
    %v1602 = vmax.f32 %v1601, 0.0
    %v1603 = vpack.c.bf16 %v1602, %v1602
    %v1604 = vld [vmem:[#allocation2 + $0x1d0] sm:$0xf]
    %v1605 = vld [vmem:[#allocation2 + $0x1d4] sm:$0xf]
    %v1606 = vld [vmem:[#allocation2 + $0x1d8] sm:$0xf]
    %v1607 = vld [vmem:[#allocation2 + $0x1dc] sm:$0xf]
    %v1608 = vld [vmem:[#allocation2 + $0x1e0] sm:$0xf]
    %v1609 = vld [vmem:[#allocation2 + $0x1e4] sm:$0xf]
    %v1610 = vld [vmem:[#allocation2 + $0x1e8] sm:$0xf]
    %v1611 = vld [vmem:[#allocation2 + $0x1ec] sm:$0xf]
    %v1612 = vld [vmem:[#allocation2 + $0x1f0] sm:$0xf]
    %v1613 = vld [vmem:[#allocation2 + $0x1f4] sm:$0xf]
    %v1614 = vld [vmem:[#allocation2 + $0x1f8] sm:$0xf]
    %v1615 = vld [vmem:[#allocation2 + $0x1fc] sm:$0xf]
    %v1616 = vld [vmem:[#allocation2 + $0x200] sm:$0xf]
    %v1617 = vld [vmem:[#allocation2 + $0x204] sm:$0xf]
    %v1618 = vld [vmem:[#allocation2 + $0x208] sm:$0xf]
    %v1619 = vld [vmem:[#allocation2 + $0x20c] sm:$0xf]
    %v1620 = vld [vmem:[#allocation2 + $0x238] sm:$0xf]
    %v1621 = vunpack.c.l.bf16 %v1620
    %v1622 = vlaneseq
    %v1623 = vshrl.u32 %v1622, 7
    %v1624 = vsub.s32 0, %v1623
    %v1625 = vrot.slane %v1621, %v1624
    %v1642 = vunpack.c.l.b16 %v1604
    %v1643 = vunpack.c.l.b16 %v1605
    %v1644 = vunpack.c.l.b16 %v1606
    %v1645 = vunpack.c.l.b16 %v1607
    %v1646 = vunpack.c.l.b16 %v1608
    %v1647 = vunpack.c.l.b16 %v1609
    %v1648 = vunpack.c.l.b16 %v1610
    %v1649 = vunpack.c.l.b16 %v1611
    %v1650 = vunpack.c.l.b16 %v1612
    %v1651 = vunpack.c.l.b16 %v1613
    %v1652 = vunpack.c.l.b16 %v1614
    %v1653 = vunpack.c.l.b16 %v1615
    %v1654 = vunpack.c.l.b16 %v1616
    %v1655 = vunpack.c.l.b16 %v1617
    %v1656 = vunpack.c.l.b16 %v1618
    %v1657 = vunpack.c.l.b16 %v1619
    %v1658 = vpack.c.b16 %v1643, %v1642
    %v1659 = vpack.c.b16 %v1645, %v1644
    %v1660 = vpack.c.b16 %v1647, %v1646
    %v1661 = vpack.c.b16 %v1649, %v1648
    %v1662 = vpack.c.b16 %v1651, %v1650
    %v1663 = vpack.c.b16 %v1653, %v1652
    %v1664 = vpack.c.b16 %v1655, %v1654
    %v1665 = vpack.c.b16 %v1657, %v1656
    %1674 = vmatprep.subr.bf16.mxu0 0
    %1675 = vmatpush1.bf16.msra.mxu0 %v1658
    %1676 = vmatprep.subr.bf16.mxu0 0
    %1677 = vmatpush1.bf16.msra.mxu0 %v1659
    %1678 = vmatprep.subr.bf16.mxu0 0
    %1679 = vmatpush1.bf16.msra.mxu0 %v1660
    %1680 = vmatprep.subr.bf16.mxu0 0
    %1681 = vmatpush1.bf16.msra.mxu0 %v1661
    %1682 = vmatprep.subr.bf16.mxu0 0
    %1683 = vmatpush1.bf16.msra.mxu0 %v1662
    %1684 = vmatprep.subr.bf16.mxu0 0
    %1685 = vmatpush1.bf16.msra.mxu0 %v1663
    %1686 = vmatprep.subr.bf16.mxu0 0
    %1687 = vmatpush1.bf16.msra.mxu0 %v1664
    %1688 = vmatprep.subr.bf16.mxu0 0
    %1689 = vmatpush1.bf16.msra.mxu0 %v1665
    %1690 = vmatprep.subr.bf16.mxu0 0
    %1691 = vmatpush1.bf16.msra.mxu0 0
    %1692 = vmatprep.subr.bf16.mxu0 0
    %1693 = vmatpush1.bf16.msra.mxu0 0
    %1694 = vmatprep.subr.bf16.mxu0 0
    %1695 = vmatpush1.bf16.msra.mxu0 0
    %1696 = vmatprep.subr.bf16.mxu0 0
    %1697 = vmatpush1.bf16.msra.mxu0 0
    %1698 = vmatprep.subr.bf16.mxu0 0
    %1699 = vmatpush1.bf16.msra.mxu0 0
    %1700 = vmatprep.subr.bf16.mxu0 0
    %1701 = vmatpush1.bf16.msra.mxu0 0
    %1702 = vmatprep.subr.bf16.mxu0 0
    %1703 = vmatpush1.bf16.msra.mxu0 0
    %1704 = vmatprep.subr.bf16.mxu0 0
    %1705 = vmatpush1.bf16.msra.mxu0 0
    %1706 = vmatprep.mubr.bf16.mxu0 0
    %1707 = vmatmul.mubr.bf16.gmra.mrb[0].mxu0 %v1603
    %v1708 = vpop.f32.mrb[0].mxu0
    %v1709 = vadd.f32 %v1625, %v1708
    %v1710 = vpop.f32.mrb[0].mxu0
    %v1711 = vpop.f32.mrb[0].mxu0
    %v1712 = vpop.f32.mrb[0].mxu0
    %1713 = vdwg.mxu0
    %1714 = vst [vmem:[%s2] sm:$0xff] %v1709
    // Predicated region
    $region14: #{dq_forward.1} parent=1 // pred_check
      _
    $region15: #{dq_forward.1} parent=1 // pred_check_branch
      %1716 = sbr.rel (0) target = $region17
    $region16: #{dq_forward.1} parent=1 // pred_region
      _
    $region17: #{dq_forward.1} parent=1 // pred_fallthru
      _
    // Predicated region
    $region18: #{dq_forward.1} parent=1 // pred_check
      _
    $region19: #{dq_forward.1} parent=1 // pred_check_branch
      %1718 = sbr.rel (0) target = $region21
    $region20: #{dq_forward.1} parent=1 // pred_region
      _
    $region21: #{dq_forward.1} parent=1 // pred_fallthru
      _
    %1719 = vsyncpa [#allocation3], 1

</llo_original>
